<compile_context>
chip_gen: v7x
topology: tpu7x:2x2x1
jax: 0.10.0
libtpu: 0.0.40
codegen_flags: <defaults>
</compile_context>

<pallas_src>
import functools

import jax
import jax.numpy as jnp
from jax.experimental import pallas as pl
from jax.experimental.pallas import tpu as pltpu

EPS = 1e-5  # nn.BatchNorm2d default


# --------------------------------------------------------------------------
# small helpers
# --------------------------------------------------------------------------
def _nbytes(shape, dtype):
    n = 1
    for d in shape:
        n *= int(d)
    return n * jnp.dtype(dtype).itemsize


def _compiler_params(n_grid_axes, block_bytes, scratch_bytes=0):
    # double-buffered per-step blocks + scratch + headroom, clamped to 48 MiB
    # so the same number leaves headroom on v7x (64 MiB / TC) and is trivially
    # safe on v5e/v6e (128 MiB).
    need = 2 * block_bytes + scratch_bytes + (2 << 20)
    vmem = int(min(max(need, 16 << 20), 48 << 20))
    return pltpu.CompilerParams(
        dimension_semantics=("parallel",) * n_grid_axes,
        vmem_limit_bytes=vmem)


def _bn_scale_bias(sq, count, gamma, beta):
    """Finalize train-mode BN from packed (..., 2, C) partial sums."""
    axes = tuple(range(sq.ndim - 2))
    tot = jnp.sum(sq, axis=axes) if axes else sq      # (2, C)
    mean = tot[0] / count
    var = tot[1] / count - mean * mean                # biased variance (training BN)
    scale = gamma * jax.lax.rsqrt(var + EPS)
    bias = beta - mean * scale
    return jnp.stack([scale, bias], axis=1).astype(jnp.float32)   # (C, 2)


def _pick_lane_tile(hw):
    # Whole spatial extent when it comfortably fits in a block; otherwise the
    # largest lane-dense tile that divides it.  (TL == HW is always a legal
    # block dim since it equals the full array extent.)
    if hw <= 4096:
        return hw
    for t in (4096, 2048, 1024, 512, 256, 128):
        if hw % t == 0:
            return t
    return hw


def _pick_batch_block(n, t_steps, per_image_bytes, target=4 << 20):
    """Largest batch-block B (divisor of n) keeping the per-step block under
    `target` bytes while leaving >= 2 grid steps when the problem allows it
    (pipelining overlap + v7x 2-TC split)."""
    best = 1
    for b in range(1, n + 1):
        if n % b:
            continue
        if b * per_image_bytes > target:
            continue
        if (n // b) * t_steps >= 2:
            best = b
    return best


# --------------------------------------------------------------------------
# kernels
# --------------------------------------------------------------------------
def _conv1x1_stats_kernel(x_ref, w_ref, h_ref, sq_ref):
    # x_ref: [B, Cin, TL] f32   w_ref: [P, Cin] bf16
    # h_ref: [B, P, TL]  bf16   sq_ref: [1, 1, 2, P] f32
    B = x_ref.shape[0]
    P = w_ref.shape[0]
    s = jnp.zeros((P, 1), jnp.float32)
    q = jnp.zeros((P, 1), jnp.float32)
    for b in range(B):                                   # static unroll
        h = jnp.dot(w_ref[...], x_ref[b].astype(jnp.bfloat16),
                    preferred_element_type=jnp.float32)  # [P, TL] f32
        h_ref[b] = h.astype(h_ref.dtype)
        s = s + jnp.sum(h, axis=1, keepdims=True)
        q = q + jnp.sum(h * h, axis=1, keepdims=True)
    sq_ref[...] = jnp.concatenate([s, q], axis=1).T[None, None]   # [1,1,2,P]


def _bn_relu_conv3x3_stats_kernel(h_ref, sc_ref, w_ref, o_ref, sq_ref,
                                  ap_ref, col_ref, *, H, W, Ppad):
    # h_ref: [1, P, HW] bf16   sc_ref: [P, 2] f32   w_ref: [P, 9*Ppad] bf16
    # o_ref: [1, P, HW] bf16   sq_ref: [1, 2, P] f32
    # ap_ref: [Ppad, PADW] bf16 (zero-haloed rows), col_ref: [9*Ppad, HW] bf16
    P = h_ref.shape[1]
    HW = H * W
    pad = W + 1                                          # flat halo width per side

    a = jnp.maximum(h_ref[0].astype(jnp.float32) * sc_ref[:, 0:1]
                    + sc_ref[:, 1:2], 0.0)               # [P, HW] f32
    a = a.astype(jnp.bfloat16)
    if Ppad > P:
        # zero pad rows so the zero weight-pad columns never see junk/NaN
        a = jnp.concatenate([a, jnp.zeros((Ppad - P, HW), jnp.bfloat16)], axis=0)

    # zero only the two small halo bands, then write the interior
    ap_ref[:, 0:pad] = jnp.zeros((Ppad, pad), ap_ref.dtype)
    ap_ref[:, pad + HW:pad + HW + pad] = jnp.zeros((Ppad, pad), ap_ref.dtype)
    ap_ref[:, pad:pad + HW] = a

    # im2col: each 3x3 tap is a contiguous lane-slice of the haloed buffer.
    # Vertical OOB falls in the zero halo; only horizontal wrap needs masking.
    # Build the two wrap masks once (not per tap).
    ww = jax.lax.broadcasted_iota(jnp.int32, (Ppad, HW), 1) % W
    mask_l = ww != 0            # valid lanes for kx = 0 (shift -1)
    mask_r = ww != (W - 1)      # valid lanes for kx = 2 (shift +1)
    zeros = jnp.zeros((Ppad, HW), jnp.bfloat16)
    for ky in range(3):
        for kx in range(3):
            tap = ky * 3 + kx
            start = pad + (ky - 1) * W + (kx - 1)
            win = ap_ref[:, start:start + HW]            # [Ppad, HW]
            if kx == 0:
                win = jnp.where(mask_l, win, zeros)
            elif kx == 2:
                win = jnp.where(mask_r, win, zeros)
            col_ref[tap * Ppad:(tap + 1) * Ppad, :] = win   # 8-sublane aligned

    # single MXU matmul, K = 9*Ppad
    o = jnp.dot(w_ref[...], col_ref[...],
                preferred_element_type=jnp.float32)      # [P, HW] f32
    o_ref[...] = o.astype(o_ref.dtype)[None]
    s = jnp.sum(o, axis=1, keepdims=True)
    q = jnp.sum(o * o, axis=1, keepdims=True)
    sq_ref[...] = jnp.concatenate([s, q], axis=1).T[None]          # [1,2,P]


def _bn_relu_conv1x1_stats_kernel(h_ref, sc_ref, w_ref, o_ref, sq_ref):
    # h_ref: [B, P, TL] bf16   sc_ref: [P, 2] f32   w_ref: [Cout, P] bf16
    # o_ref: [B, Cout, TL] bf16   sq_ref: [1, 1, 2, Cout] f32
    B = h_ref.shape[0]
    Cout = w_ref.shape[0]
    s = jnp.zeros((Cout, 1), jnp.float32)
    q = jnp.zeros((Cout, 1), jnp.float32)
    for b in range(B):                                   # static unroll
        a = jnp.maximum(h_ref[b].astype(jnp.float32) * sc_ref[:, 0:1]
                        + sc_ref[:, 1:2], 0.0)
        o = jnp.dot(w_ref[...], a.astype(jnp.bfloat16),
                    preferred_element_type=jnp.float32)  # [Cout, TL] f32
        o_ref[b] = o.astype(o_ref.dtype)
        s = s + jnp.sum(o, axis=1, keepdims=True)
        q = q + jnp.sum(o * o, axis=1, keepdims=True)
    sq_ref[...] = jnp.concatenate([s, q], axis=1).T[None, None]   # [1,1,2,Cout]


def _bn_residual_relu_kernel(h_ref, x_ref, sc_ref, o_ref):
    # h_ref: [B, Cout, TL] bf16   x_ref: [B, Cout, TL] f32   sc_ref: [Cout, 2]
    y = (h_ref[...].astype(jnp.float32) * sc_ref[:, 0:1]
         + sc_ref[:, 1:2] + x_ref[...])
    o_ref[...] = jnp.maximum(y, 0.0)


# --------------------------------------------------------------------------
# wrapper
# --------------------------------------------------------------------------
@jax.jit
def bottleneck_forward(x_nchw, w1, w2_hwio, w3, g1, b1, g2, b2, g3, b3):
    """ResNet Bottleneck forward (train-mode BN), stride=1 / no downsample.

    x_nchw:  [N, Cin, H, W] f32 (PyTorch layout)
    w1:      [Cin, P]       conv1 1x1 weight
    w2_hwio: [3, 3, P, P]   conv2 3x3 weight (HWIO)
    w3:      [P, 4P]        conv3 1x1 weight
    Returns  [N, 4P, H, W] f32.
    """
    N, Cin, H, W = x_nchw.shape
    P = w1.shape[1]
    Cout = w3.shape[1]
    assert Cin == Cout, "identity residual requires inplanes == planes*4"
    HW = H * W
    TL = _pick_lane_tile(HW)
    assert HW % TL == 0
    T = HW // TL
    count = float(N * HW)
    f32 = jnp.float32
    bf16 = jnp.bfloat16
    Ppad = ((P + 7) // 8) * 8            # 8-sublane aligned tap slabs

    # channels-first: a pure reshape, no transpose / extra HBM pass
    x3 = x_nchw.reshape(N, Cin, HW).astype(f32)
    w1t = jnp.transpose(w1, (1, 0)).astype(bf16)                   # [P, Cin]
    w2t = jnp.transpose(w2_hwio, (3, 0, 1, 2))                     # [P,3,3,P]
    w2t = jnp.pad(w2t, ((0, 0), (0, 0), (0, 0), (0, Ppad - P)))
    w2m = w2t.reshape(P, 9 * Ppad).astype(bf16)
    w3t = jnp.transpose(w3, (1, 0)).astype(bf16)                   # [Cout, P]

    # ---- stage 1: conv1 (1x1) + BN1 partial stats --------------------------
    per_img1 = _nbytes((Cin, TL), f32) + _nbytes((P, TL), bf16)
    B1 = _pick_batch_block(N, T, per_img1)
    blk1 = B1 * per_img1 + _nbytes((P, Cin), bf16) + _nbytes((2, P), f32)
    h1, sq1 = pl.pallas_call(
        _conv1x1_stats_kernel,
        grid=(N // B1, T),
        in_specs=[
            pl.BlockSpec((B1, Cin, TL), lambda n, t: (n, 0, t)),
            pl.BlockSpec((P, Cin), lambda n, t: (0, 0)),
        ],
        out_specs=(
            pl.BlockSpec((B1, P, TL), lambda n, t: (n, 0, t)),
            pl.BlockSpec((1, 1, 2, P), lambda n, t: (n, t, 0, 0)),
        ),
        out_shape=(
            jax.ShapeDtypeStruct((N, P, HW), bf16),
            jax.ShapeDtypeStruct((N // B1, T, 2, P), f32),
        ),
        compiler_params=_compiler_params(2, blk1),
    )(x3, w1t)
    sc1 = _bn_scale_bias(sq1, count, g1, b1)

    # ---- stage 2: BN1+ReLU -> conv2 (3x3, pad=1) + BN2 partial stats -------
    PADW = HW + 2 * (W + 1)
    blk2 = (2 * _nbytes((P, HW), bf16) + _nbytes((P, 2), f32)
            + _nbytes((P, 9 * Ppad), bf16) + _nbytes((2, P), f32))
    scr2 = _nbytes((Ppad, PADW), bf16) + _nbytes((9 * Ppad, HW), bf16)
    h2, sq2 = pl.pallas_call(
        functools.partial(_bn_relu_conv3x3_stats_kernel, H=H, W=W, Ppad=Ppad),
        grid=(N,),
        in_specs=[
            pl.BlockSpec((1, P, HW), lambda n: (n, 0, 0)),
            pl.BlockSpec((P, 2), lambda n: (0, 0)),
            pl.BlockSpec((P, 9 * Ppad), lambda n: (0, 0)),
        ],
        out_specs=(
            pl.BlockSpec((1, P, HW), lambda n: (n, 0, 0)),
            pl.BlockSpec((1, 2, P), lambda n: (n, 0, 0)),
        ),
        out_shape=(
            jax.ShapeDtypeStruct((N, P, HW), bf16),
            jax.ShapeDtypeStruct((N, 2, P), f32),
        ),
        scratch_shapes=[
            pltpu.VMEM((Ppad, PADW), bf16),       # zero-haloed activation rows
            pltpu.VMEM((9 * Ppad, HW), bf16),     # im2col column buffer
        ],
        compiler_params=_compiler_params(1, blk2, scr2),
    )(h1, sc1, w2m)
    sc2 = _bn_scale_bias(sq2, count, g2, b2)

    # ---- stage 3: BN2+ReLU -> conv3 (1x1) + BN3 partial stats --------------
    per_img3 = _nbytes((P, TL), bf16) + _nbytes((Cout, TL), bf16)
    B3 = _pick_batch_block(N, T, per_img3)
    blk3 = (B3 * per_img3 + _nbytes((P, 2), f32)
            + _nbytes((Cout, P), bf16) + _nbytes((2, Cout), f32))
    h3, sq3 = pl.pallas_call(
        _bn_relu_conv1x1_stats_kernel,
        grid=(N // B3, T),
        in_specs=[
            pl.BlockSpec((B3, P, TL), lambda n, t: (n, 0, t)),
            pl.BlockSpec((P, 2), lambda n, t: (0, 0)),
            pl.BlockSpec((Cout, P), lambda n, t: (0, 0)),
        ],
        out_specs=(
            pl.BlockSpec((B3, Cout, TL), lambda n, t: (n, 0, t)),
            pl.BlockSpec((1, 1, 2, Cout), lambda n, t: (n, t, 0, 0)),
        ),
        out_shape=(
            jax.ShapeDtypeStruct((N, Cout, HW), bf16),
            jax.ShapeDtypeStruct((N // B3, T, 2, Cout), f32),
        ),
        compiler_params=_compiler_params(2, blk3),
    )(h2, sc2, w3t)
    sc3 = _bn_scale_bias(sq3, count, g3, b3)

    # ---- stage 4: BN3 + identity residual + ReLU ---------------------------
    per_img4 = (_nbytes((Cout, TL), bf16) + _nbytes((Cin, TL), f32)
                + _nbytes((Cout, TL), f32))
    B4 = _pick_batch_block(N, T, per_img4)
    blk4 = B4 * per_img4 + _nbytes((Cout, 2), f32)
    out3 = pl.pallas_call(
        _bn_residual_relu_kernel,
        grid=(N // B4, T),
        in_specs=[
            pl.BlockSpec((B4, Cout, TL), lambda n, t: (n, 0, t)),
            pl.BlockSpec((B4, Cin, TL), lambda n, t: (n, 0, t)),
            pl.BlockSpec((Cout, 2), lambda n, t: (0, 0)),
        ],
        out_specs=pl.BlockSpec((B4, Cout, TL), lambda n, t: (n, 0, t)),
        out_shape=jax.ShapeDtypeStruct((N, Cout, HW), f32),
        compiler_params=_compiler_params(2, blk4),
    )(h3, x3, sc3)

    return out3.reshape(N, Cout, H, W)


# --------------------------------------------------------------------------
# pure-JAX reference (f32, train-mode BN) for verification
# --------------------------------------------------------------------------
def _reference(x_nchw, w1, w2_hwio, w3, g1, b1, g2, b2, g3, b3):
    x = jnp.transpose(x_nchw, (0, 2, 3, 1))

    def bn(h, g, b):
        mean = h.mean(axis=(0, 1, 2), keepdims=True)
        var = ((h - mean) ** 2).mean(axis=(0, 1, 2), keepdims=True)
        return (h - mean) * jax.lax.rsqrt(var + EPS) * g.reshape(1, 1, 1, -1) \
            + b.reshape(1, 1, 1, -1)

    h = jnp.einsum('nhwc,cp->nhwp', x, w1, precision=jax.lax.Precision.HIGHEST)
    h = jax.nn.relu(bn(h, g1, b1))
    h = jax.lax.conv_general_dilated(
        h, w2_hwio, window_strides=(1, 1), padding='SAME',
        dimension_numbers=('NHWC', 'HWIO', 'NHWC'),
        precision=jax.lax.Precision.HIGHEST)
    h = jax.nn.relu(bn(h, g2, b2))
    h = jnp.einsum('nhwc,cp->nhwp', h, w3, precision=jax.lax.Precision.HIGHEST)
    h = bn(h, g3, b3)
    out = jax.nn.relu(h + x)
    return jnp.transpose(out, (0, 3, 1, 2))


if __name__ == "__main__":
    # Shapes consistent with the module: planes=4, inplanes=planes*4=16,
    # stride=1, downsample=None  ->  x: [2, 16, 16, 16] (NCHW).
    N, planes, H, W = 2, 4, 16, 16
    inplanes = planes * 4

    key = jax.random.PRNGKey(0)
    ks = jax.random.split(key, 10)

    x = jax.random.normal(ks[0], (N, inplanes, H, W), jnp.float32)

    # Conv weights stored directly in the layouts the wrapper consumes:
    #   conv1: [Cin, P] (1x1), conv2: [3, 3, P, P] (HWIO), conv3: [P, 4P] (1x1)
    w1 = jax.random.normal(ks[1], (inplanes, planes), jnp.float32) * (2.0 / inplanes) ** 0.5
    w2 = jax.random.normal(ks[2], (3, 3, planes, planes), jnp.float32) * (2.0 / (9 * planes)) ** 0.5
    w3 = jax.random.normal(ks[3], (planes, planes * 4), jnp.float32) * (2.0 / planes) ** 0.5

    g1 = 1.0 + 0.1 * jax.random.normal(ks[4], (planes,), jnp.float32)
    b1 = 0.1 * jax.random.normal(ks[5], (planes,), jnp.float32)
    g2 = 1.0 + 0.1 * jax.random.normal(ks[6], (planes,), jnp.float32)
    b2 = 0.1 * jax.random.normal(ks[7], (planes,), jnp.float32)
    g3 = 1.0 + 0.1 * jax.random.normal(ks[8], (planes * 4,), jnp.float32)
    b3 = 0.1 * jax.random.normal(ks[9], (planes * 4,), jnp.float32)

    out = bottleneck_forward(x, w1, w2, w3, g1, b1, g2, b2, g3, b3)
    out = jax.block_until_ready(out)

    ref = jax.block_until_ready(_reference(x, w1, w2, w3, g1, b1, g2, b2, g3, b3))

    assert out.shape == (N, planes * 4, H, W), out.shape
    # bf16 MXU inputs + bf16 inter-stage activations (f32 accumulation, f32 BN
    # stats) vs. an all-f32 reference.
    assert jnp.allclose(out, ref, rtol=5e-2, atol=1e-1), \
        f"max abs error: {float(jnp.max(jnp.abs(out - ref)))}"
    print("KERNEL_OK")
</pallas_src>

<mosaic_0001>
module attributes {stable_mosaic.version = 11 : i64} {
  func.func @_conv1x1_stats_kernel(%arg0: i32, %arg1: i32, %arg2: memref<1x16x256xf32, #tpu.memory_space<vmem>>, %arg3: memref<4x16xbf16, #tpu.memory_space<vmem>>, %arg4: memref<1x4x256xbf16, #tpu.memory_space<vmem>>, %arg5: memref<1x1x2x4xf32, #tpu.memory_space<vmem>>) attributes {dimension_semantics = [#tpu.dimension_semantics<parallel>, #tpu.dimension_semantics<parallel>], iteration_bounds = array<i64: 2, 1>, scalar_prefetch = 0 : i64, scratch_operands = 0 : i64, tpu.core_type = #tpu.core_type<tc>, window_params = [{transform_indices = @transform_0, window_bounds = array<i64: 1, 16, 256>}, {pipeline_mode = #tpu.pipeline_mode<synchronous>, transform_indices = @transform_1, window_bounds = array<i64: 4, 16>}, {transform_indices = @transform_2, window_bounds = array<i64: 1, 4, 256>}, {transform_indices = @transform_3, window_bounds = array<i64: 1, 1, 2, 4>}]} {
    %cst = arith.constant 0.000000e+00 : f32
    %0 = vector.broadcast %cst : f32 to vector<4x1xf32>
    %cst_0 = arith.constant 0.000000e+00 : f32
    %1 = vector.broadcast %cst_0 : f32 to vector<4x1xf32>
    %c0 = arith.constant 0 : index
    %c0_1 = arith.constant 0 : index
    %2 = vector.load %arg3[%c0, %c0_1] : memref<4x16xbf16, #tpu.memory_space<vmem>>, vector<4x16xbf16>
    %c0_2 = arith.constant 0 : index
    %c0_3 = arith.constant 0 : index
    %c0_4 = arith.constant 0 : index
    %3 = vector.load %arg2[%c0_2, %c0_3, %c0_4] : memref<1x16x256xf32, #tpu.memory_space<vmem>>, vector<1x16x256xf32>
    %4 = vector.shape_cast %3 : vector<1x16x256xf32> to vector<16x256xf32>
    %5 = arith.truncf %4 : vector<16x256xf32> to vector<16x256xbf16>
    %cst_5 = arith.constant dense<0.000000e+00> : vector<4x256xf32>
    %6 = tpu.matmul %2, %5, %cst_5 {dimension_numbers = #tpu.dot_dimension_numbers<[1], [0], [0], [1], [0, 0, 1, 1], [], []>} : vector<4x16xbf16>, vector<16x256xbf16>, vector<4x256xf32> -> vector<4x256xf32>
    %7 = arith.truncf %6 : vector<4x256xf32> to vector<4x256xbf16>
    %c0_6 = arith.constant 0 : index
    %c0_7 = arith.constant 0 : index
    %c0_8 = arith.constant 0 : index
    %8 = vector.load %arg4[%c0_6, %c0_7, %c0_8] : memref<1x4x256xbf16, #tpu.memory_space<vmem>>, vector<1x4x256xbf16>
    %9 = vector.shape_cast %8 : vector<1x4x256xbf16> to vector<4x256xbf16>
    %10 = vector.shape_cast %7 : vector<4x256xbf16> to vector<1x4x256xbf16>
    tpu.vector_store %arg4[%c0_6, %c0_7, %c0_8], %10 {strides = array<i32>} : memref<1x4x256xbf16, #tpu.memory_space<vmem>>, vector<1x4x256xbf16>,
    %cst_9 = arith.constant dense<0.000000e+00> : vector<4xf32>
    %11 = vector.multi_reduction <add>, %6, %cst_9 [1] : vector<4x256xf32> to vector<4xf32>
    %12 = vector.shape_cast %11 : vector<4xf32> to vector<4x1xf32>
    %13 = arith.addf %0, %12 : vector<4x1xf32>
    %14 = arith.mulf %6, %6 : vector<4x256xf32>
    %cst_10 = arith.constant dense<0.000000e+00> : vector<4xf32>
    %15 = vector.multi_reduction <add>, %14, %cst_10 [1] : vector<4x256xf32> to vector<4xf32>
    %16 = vector.shape_cast %15 : vector<4xf32> to vector<4x1xf32>
    %17 = arith.addf %1, %16 : vector<4x1xf32>
    %18 = tpu.concatenate %13, %17 in 1 : vector<4x1xf32>, vector<4x1xf32> -> vector<4x2xf32>
    %19 = tpu.transpose %18, [1, 0] : vector<4x2xf32> -> vector<2x4xf32>
    %20 = vector.shape_cast %19 : vector<2x4xf32> to vector<1x1x2x4xf32>
    %c0_11 = arith.constant 0 : index
    %c0_12 = arith.constant 0 : index
    %c0_13 = arith.constant 0 : index
    %c0_14 = arith.constant 0 : index
    %21 = vector.load %arg5[%c0_11, %c0_12, %c0_13, %c0_14] : memref<1x1x2x4xf32, #tpu.memory_space<vmem>>, vector<1x1x2x4xf32>
    tpu.vector_store %arg5[%c0_11, %c0_12, %c0_13, %c0_14], %20 {strides = array<i32>} : memref<1x1x2x4xf32, #tpu.memory_space<vmem>>, vector<1x1x2x4xf32>,
    return
  }
  func.func @transform_0(%arg0: i32, %arg1: i32) -> (i32, i32, i32) {
    %c0_i32 = arith.constant 0 : i32
    %c0_i32_0 = arith.constant 0 : i32
    return %arg0, %c0_i32, %arg1 : i32, i32, i32
  }
  func.func @transform_1(%arg0: i32, %arg1: i32) -> (i32, i32) {
    %c0_i32 = arith.constant 0 : i32
    %c0_i32_0 = arith.constant 0 : i32
    %c0_i32_1 = arith.constant 0 : i32
    return %c0_i32, %c0_i32_0 : i32, i32
  }
  func.func @transform_2(%arg0: i32, %arg1: i32) -> (i32, i32, i32) {
    %c0_i32 = arith.constant 0 : i32
    %c0_i32_0 = arith.constant 0 : i32
    return %arg0, %c0_i32, %arg1 : i32, i32, i32
  }
  func.func @transform_3(%arg0: i32, %arg1: i32) -> (i32, i32, i32, i32) {
    %c0_i32 = arith.constant 0 : i32
    %c0_i32_0 = arith.constant 0 : i32
    %c0_i32_1 = arith.constant 0 : i32
    return %arg0, %arg1, %c0_i32, %c0_i32_0 : i32, i32, i32, i32
  }
}

module attributes {stable_mosaic.version = 11 : i64} {
  func.func @_bn_relu_conv3x3_stats_kernel(%arg0: i32, %arg1: memref<1x4x256xbf16, #tpu.memory_space<vmem>>, %arg2: memref<4x2xf32, #tpu.memory_space<vmem>>, %arg3: memref<4x72xbf16, #tpu.memory_space<vmem>>, %arg4: memref<1x4x256xbf16, #tpu.memory_space<vmem>>, %arg5: memref<1x2x4xf32, #tpu.memory_space<vmem>>, %arg6: memref<8x290xbf16, #tpu.memory_space<vmem>>, %arg7: memref<72x256xbf16, #tpu.memory_space<vmem>>) attributes {dimension_semantics = [#tpu.dimension_semantics<parallel>], iteration_bounds = array<i64: 2>, scalar_prefetch = 0 : i64, scratch_operands = 2 : i64, tpu.core_type = #tpu.core_type<tc>, window_params = [{transform_indices = @transform_0, window_bounds = array<i64: 1, 4, 256>}, {pipeline_mode = #tpu.pipeline_mode<synchronous>, transform_indices = @transform_1, window_bounds = array<i64: 4, 2>}, {pipeline_mode = #tpu.pipeline_mode<synchronous>, transform_indices = @transform_2, window_bounds = array<i64: 4, 72>}, {transform_indices = @transform_3, window_bounds = array<i64: 1, 4, 256>}, {transform_indices = @transform_4, window_bounds = array<i64: 1, 2, 4>}]} {
    %c0 = arith.constant 0 : index
    %c0_0 = arith.constant 0 : index
    %c0_1 = arith.constant 0 : index
    %0 = vector.load %arg1[%c0, %c0_0, %c0_1] : memref<1x4x256xbf16, #tpu.memory_space<vmem>>, vector<1x4x256xbf16>
    %1 = vector.shape_cast %0 : vector<1x4x256xbf16> to vector<4x256xbf16>
    %2 = arith.extf %1 : vector<4x256xbf16> to vector<4x256xf32>
    %c0_2 = arith.constant 0 : index
    %c0_3 = arith.constant 0 : index
    %3 = vector.load %arg2[%c0_2, %c0_3] : memref<4x2xf32, #tpu.memory_space<vmem>>, vector<4x1xf32>
    %4 = vector.broadcast %3 : vector<4x1xf32> to vector<4x256xf32>
    %5 = arith.mulf %2, %4 : vector<4x256xf32>
    %c0_4 = arith.constant 0 : index
    %c1 = arith.constant 1 : index
    %6 = vector.load %arg2[%c0_4, %c1] : memref<4x2xf32, #tpu.memory_space<vmem>>, vector<4x1xf32>
    %7 = vector.broadcast %6 : vector<4x1xf32> to vector<4x256xf32>
    %8 = arith.addf %5, %7 : vector<4x256xf32>
    %cst = arith.constant 0.000000e+00 : f32
    %9 = vector.broadcast %cst : f32 to vector<4x256xf32>
    %10 = arith.maximumf %8, %9 : vector<4x256xf32>
    %11 = arith.truncf %10 : vector<4x256xf32> to vector<4x256xbf16>
    %cst_5 = arith.constant 0.000000e+00 : bf16
    %12 = vector.broadcast %cst_5 : bf16 to vector<4x256xbf16>
    %13 = tpu.concatenate %11, %12 in 0 : vector<4x256xbf16>, vector<4x256xbf16> -> vector<8x256xbf16>
    %cst_6 = arith.constant 0.000000e+00 : bf16
    %14 = vector.broadcast %cst_6 : bf16 to vector<8x17xbf16>
    %c0_7 = arith.constant 0 : index
    %c0_8 = arith.constant 0 : index
    %15 = vector.load %arg6[%c0_7, %c0_8] : memref<8x290xbf16, #tpu.memory_space<vmem>>, vector<8x17xbf16>
    tpu.vector_store %arg6[%c0_7, %c0_8], %14 {strides = array<i32>} : memref<8x290xbf16, #tpu.memory_space<vmem>>, vector<8x17xbf16>,
    %cst_9 = arith.constant 0.000000e+00 : bf16
    %16 = vector.broadcast %cst_9 : bf16 to vector<8x17xbf16>
    %c0_10 = arith.constant 0 : index
    %c273 = arith.constant 273 : index
    %17 = vector.load %arg6[%c0_10, %c273] : memref<8x290xbf16, #tpu.memory_space<vmem>>, vector<8x17xbf16>
    tpu.vector_store %arg6[%c0_10, %c273], %16 {strides = array<i32>} : memref<8x290xbf16, #tpu.memory_space<vmem>>, vector<8x17xbf16>,
    %c0_11 = arith.constant 0 : index
    %c17 = arith.constant 17 : index
    %18 = vector.load %arg6[%c0_11, %c17] : memref<8x290xbf16, #tpu.memory_space<vmem>>, vector<8x256xbf16>
    tpu.vector_store %arg6[%c0_11, %c17], %13 {strides = array<i32>} : memref<8x290xbf16, #tpu.memory_space<vmem>>, vector<8x256xbf16>,
    %19 = tpu.iota {dimensions = array<i32: 1>} : vector<8x256xi32>
    %c16_i32 = arith.constant 16 : i32
    %c0_i32 = arith.constant 0 : i32
    %20 = arith.cmpi eq, %c16_i32, %c0_i32 : i32
    %c1_i32 = arith.constant 1 : i32
    %21 = arith.select %20, %c1_i32, %c16_i32 : i32
    %22 = vector.broadcast %21 : i32 to vector<8x256xi32>
    %23 = arith.remsi %19, %22 : vector<8x256xi32>
    %c0_i32_12 = arith.constant 0 : i32
    %24 = vector.broadcast %c0_i32_12 : i32 to vector<8x256xi32>
    %25 = arith.cmpi ne, %23, %24 : vector<8x256xi32>
    %c0_i32_13 = arith.constant 0 : i32
    %26 = vector.broadcast %c0_i32_13 : i32 to vector<8x256xi32>
    %27 = arith.cmpi slt, %23, %26 : vector<8x256xi32>
    %c0_i32_14 = arith.constant 0 : i32
    %28 = arith.cmpi slt, %21, %c0_i32_14 : i32
    %29 = vector.broadcast %28 : i1 to vector<8x256xi1>
    %30 = vector.broadcast %29 : vector<8x256xi1> to vector<8x256xi1>
    %31 = arith.xori %27, %30 : vector<8x256xi1>
    %32 = arith.andi %31, %25 : vector<8x256xi1>
    %33 = vector.broadcast %21 : i32 to vector<8x256xi32>
    %34 = arith.addi %23, %33 : vector<8x256xi32>
    %35 = arith.select %32, %34, %23 : vector<8x256xi1>, vector<8x256xi32>
    %c0_i32_15 = arith.constant 0 : i32
    %36 = vector.broadcast %c0_i32_15 : i32 to vector<8x256xi32>
    %37 = arith.cmpi ne, %35, %36 : vector<8x256xi32>
    %c15_i32 = arith.constant 15 : i32
    %38 = vector.broadcast %c15_i32 : i32 to vector<8x256xi32>
    %39 = arith.cmpi ne, %35, %38 : vector<8x256xi32>
    %cst_16 = arith.constant 0.000000e+00 : bf16
    %40 = vector.broadcast %cst_16 : bf16 to vector<8x256xbf16>
    %c0_17 = arith.constant 0 : index
    %c0_18 = arith.constant 0 : index
    %41 = vector.load %arg6[%c0_17, %c0_18] : memref<8x290xbf16, #tpu.memory_space<vmem>>, vector<8x256xbf16>
    %42 = arith.select %37, %41, %40 : vector<8x256xi1>, vector<8x256xbf16>
    %c0_19 = arith.constant 0 : index
    %c0_20 = arith.constant 0 : index
    %43 = vector.load %arg7[%c0_19, %c0_20] : memref<72x256xbf16, #tpu.memory_space<vmem>>, vector<8x256xbf16>
    tpu.vector_store %arg7[%c0_19, %c0_20], %42 {strides = array<i32>} : memref<72x256xbf16, #tpu.memory_space<vmem>>, vector<8x256xbf16>,
    %c0_21 = arith.constant 0 : index
    %c1_22 = arith.constant 1 : index
    %44 = vector.load %arg6[%c0_21, %c1_22] : memref<8x290xbf16, #tpu.memory_space<vmem>>, vector<8x256xbf16>
    %c8 = arith.constant 8 : index
    %c0_23 = arith.constant 0 : index
    %45 = vector.load %arg7[%c8, %c0_23] : memref<72x256xbf16, #tpu.memory_space<vmem>>, vector<8x256xbf16>
    tpu.vector_store %arg7[%c8, %c0_23], %44 {strides = array<i32>} : memref<72x256xbf16, #tpu.memory_space<vmem>>, vector<8x256xbf16>,
    %c0_24 = arith.constant 0 : index
    %c2 = arith.constant 2 : index
    %46 = vector.load %arg6[%c0_24, %c2] : memref<8x290xbf16, #tpu.memory_space<vmem>>, vector<8x256xbf16>
    %47 = arith.select %39, %46, %40 : vector<8x256xi1>, vector<8x256xbf16>
    %c16 = arith.constant 16 : index
    %c0_25 = arith.constant 0 : index
    %48 = vector.load %arg7[%c16, %c0_25] : memref<72x256xbf16, #tpu.memory_space<vmem>>, vector<8x256xbf16>
    tpu.vector_store %arg7[%c16, %c0_25], %47 {strides = array<i32>} : memref<72x256xbf16, #tpu.memory_space<vmem>>, vector<8x256xbf16>,
    %c0_26 = arith.constant 0 : index
    %c16_27 = arith.constant 16 : index
    %49 = vector.load %arg6[%c0_26, %c16_27] : memref<8x290xbf16, #tpu.memory_space<vmem>>, vector<8x256xbf16>
    %50 = arith.select %37, %49, %40 : vector<8x256xi1>, vector<8x256xbf16>
    %c24 = arith.constant 24 : index
    %c0_28 = arith.constant 0 : index
    %51 = vector.load %arg7[%c24, %c0_28] : memref<72x256xbf16, #tpu.memory_space<vmem>>, vector<8x256xbf16>
    tpu.vector_store %arg7[%c24, %c0_28], %50 {strides = array<i32>} : memref<72x256xbf16, #tpu.memory_space<vmem>>, vector<8x256xbf16>,
    %c0_29 = arith.constant 0 : index
    %c17_30 = arith.constant 17 : index
    %52 = vector.load %arg6[%c0_29, %c17_30] : memref<8x290xbf16, #tpu.memory_space<vmem>>, vector<8x256xbf16>
    %c32 = arith.constant 32 : index
    %c0_31 = arith.constant 0 : index
    %53 = vector.load %arg7[%c32, %c0_31] : memref<72x256xbf16, #tpu.memory_space<vmem>>, vector<8x256xbf16>
    tpu.vector_store %arg7[%c32, %c0_31], %52 {strides = array<i32>} : memref<72x256xbf16, #tpu.memory_space<vmem>>, vector<8x256xbf16>,
    %c0_32 = arith.constant 0 : index
    %c18 = arith.constant 18 : index
    %54 = vector.load %arg6[%c0_32, %c18] : memref<8x290xbf16, #tpu.memory_space<vmem>>, vector<8x256xbf16>
    %55 = arith.select %39, %54, %40 : vector<8x256xi1>, vector<8x256xbf16>
    %c40 = arith.constant 40 : index
    %c0_33 = arith.constant 0 : index
    %56 = vector.load %arg7[%c40, %c0_33] : memref<72x256xbf16, #tpu.memory_space<vmem>>, vector<8x256xbf16>
    tpu.vector_store %arg7[%c40, %c0_33], %55 {strides = array<i32>} : memref<72x256xbf16, #tpu.memory_space<vmem>>, vector<8x256xbf16>,
    %c0_34 = arith.constant 0 : index
    %c32_35 = arith.constant 32 : index
    %57 = vector.load %arg6[%c0_34, %c32_35] : memref<8x290xbf16, #tpu.memory_space<vmem>>, vector<8x256xbf16>
    %58 = arith.select %37, %57, %40 : vector<8x256xi1>, vector<8x256xbf16>
    %c48 = arith.constant 48 : index
    %c0_36 = arith.constant 0 : index
    %59 = vector.load %arg7[%c48, %c0_36] : memref<72x256xbf16, #tpu.memory_space<vmem>>, vector<8x256xbf16>
    tpu.vector_store %arg7[%c48, %c0_36], %58 {strides = array<i32>} : memref<72x256xbf16, #tpu.memory_space<vmem>>, vector<8x256xbf16>,
    %c0_37 = arith.constant 0 : index
    %c33 = arith.constant 33 : index
    %60 = vector.load %arg6[%c0_37, %c33] : memref<8x290xbf16, #tpu.memory_space<vmem>>, vector<8x256xbf16>
    %c56 = arith.constant 56 : index
    %c0_38 = arith.constant 0 : index
    %61 = vector.load %arg7[%c56, %c0_38] : memref<72x256xbf16, #tpu.memory_space<vmem>>, vector<8x256xbf16>
    tpu.vector_store %arg7[%c56, %c0_38], %60 {strides = array<i32>} : memref<72x256xbf16, #tpu.memory_space<vmem>>, vector<8x256xbf16>,
    %c0_39 = arith.constant 0 : index
    %c34 = arith.constant 34 : index
    %62 = vector.load %arg6[%c0_39, %c34] : memref<8x290xbf16, #tpu.memory_space<vmem>>, vector<8x256xbf16>
    %63 = arith.select %39, %62, %40 : vector<8x256xi1>, vector<8x256xbf16>
    %c64 = arith.constant 64 : index
    %c0_40 = arith.constant 0 : index
    %64 = vector.load %arg7[%c64, %c0_40] : memref<72x256xbf16, #tpu.memory_space<vmem>>, vector<8x256xbf16>
    tpu.vector_store %arg7[%c64, %c0_40], %63 {strides = array<i32>} : memref<72x256xbf16, #tpu.memory_space<vmem>>, vector<8x256xbf16>,
    %c0_41 = arith.constant 0 : index
    %c0_42 = arith.constant 0 : index
    %65 = vector.load %arg3[%c0_41, %c0_42] : memref<4x72xbf16, #tpu.memory_space<vmem>>, vector<4x72xbf16>
    %c0_43 = arith.constant 0 : index
    %c0_44 = arith.constant 0 : index
    %66 = vector.load %arg7[%c0_43, %c0_44] : memref<72x256xbf16, #tpu.memory_space<vmem>>, vector<72x256xbf16>
    %cst_45 = arith.constant dense<0.000000e+00> : vector<4x256xf32>
    %67 = tpu.matmul %65, %66, %cst_45 {dimension_numbers = #tpu.dot_dimension_numbers<[1], [0], [0], [1], [0, 0, 1, 1], [], []>} : vector<4x72xbf16>, vector<72x256xbf16>, vector<4x256xf32> -> vector<4x256xf32>
    %68 = arith.truncf %67 : vector<4x256xf32> to vector<4x256xbf16>
    %69 = vector.shape_cast %68 : vector<4x256xbf16> to vector<1x4x256xbf16>
    %c0_46 = arith.constant 0 : index
    %c0_47 = arith.constant 0 : index
    %c0_48 = arith.constant 0 : index
    %70 = vector.load %arg4[%c0_46, %c0_47, %c0_48] : memref<1x4x256xbf16, #tpu.memory_space<vmem>>, vector<1x4x256xbf16>
    tpu.vector_store %arg4[%c0_46, %c0_47, %c0_48], %69 {strides = array<i32>} : memref<1x4x256xbf16, #tpu.memory_space<vmem>>, vector<1x4x256xbf16>,
    %cst_49 = arith.constant dense<0.000000e+00> : vector<4xf32>
    %71 = vector.multi_reduction <add>, %67, %cst_49 [1] : vector<4x256xf32> to vector<4xf32>
    %72 = vector.shape_cast %71 : vector<4xf32> to vector<4x1xf32>
    %73 = arith.mulf %67, %67 : vector<4x256xf32>
    %cst_50 = arith.constant dense<0.000000e+00> : vector<4xf32>
    %74 = vector.multi_reduction <add>, %73, %cst_50 [1] : vector<4x256xf32> to vector<4xf32>
    %75 = vector.shape_cast %74 : vector<4xf32> to vector<4x1xf32>
    %76 = tpu.concatenate %72, %75 in 1 : vector<4x1xf32>, vector<4x1xf32> -> vector<4x2xf32>
    %77 = tpu.transpose %76, [1, 0] : vector<4x2xf32> -> vector<2x4xf32>
    %78 = vector.shape_cast %77 : vector<2x4xf32> to vector<1x2x4xf32>
    %c0_51 = arith.constant 0 : index
    %c0_52 = arith.constant 0 : index
    %c0_53 = arith.constant 0 : index
    %79 = vector.load %arg5[%c0_51, %c0_52, %c0_53] : memref<1x2x4xf32, #tpu.memory_space<vmem>>, vector<1x2x4xf32>
    tpu.vector_store %arg5[%c0_51, %c0_52, %c0_53], %78 {strides = array<i32>} : memref<1x2x4xf32, #tpu.memory_space<vmem>>, vector<1x2x4xf32>,
    return
  }
  func.func @transform_0(%arg0: i32) -> (i32, i32, i32) {
    %c0_i32 = arith.constant 0 : i32
    %c0_i32_0 = arith.constant 0 : i32
    %c0_i32_1 = arith.constant 0 : i32
    return %arg0, %c0_i32, %c0_i32_0 : i32, i32, i32
  }
  func.func @transform_1(%arg0: i32) -> (i32, i32) {
    %c0_i32 = arith.constant 0 : i32
    %c0_i32_0 = arith.constant 0 : i32
    %c0_i32_1 = arith.constant 0 : i32
    return %c0_i32, %c0_i32_0 : i32, i32
  }
  func.func @transform_2(%arg0: i32) -> (i32, i32) {
    %c0_i32 = arith.constant 0 : i32
    %c0_i32_0 = arith.constant 0 : i32
    %c0_i32_1 = arith.constant 0 : i32
    return %c0_i32, %c0_i32_0 : i32, i32
  }
  func.func @transform_3(%arg0: i32) -> (i32, i32, i32) {
    %c0_i32 = arith.constant 0 : i32
    %c0_i32_0 = arith.constant 0 : i32
    %c0_i32_1 = arith.constant 0 : i32
    return %arg0, %c0_i32, %c0_i32_0 : i32, i32, i32
  }
  func.func @transform_4(%arg0: i32) -> (i32, i32, i32) {
    %c0_i32 = arith.constant 0 : i32
    %c0_i32_0 = arith.constant 0 : i32
    %c0_i32_1 = arith.constant 0 : i32
    return %arg0, %c0_i32, %c0_i32_0 : i32, i32, i32
  }
}

module attributes {stable_mosaic.version = 11 : i64} {
  func.func @_bn_relu_conv1x1_stats_kernel(%arg0: i32, %arg1: i32, %arg2: memref<1x4x256xbf16, #tpu.memory_space<vmem>>, %arg3: memref<4x2xf32, #tpu.memory_space<vmem>>, %arg4: memref<16x4xbf16, #tpu.memory_space<vmem>>, %arg5: memref<1x16x256xbf16, #tpu.memory_space<vmem>>, %arg6: memref<1x1x2x16xf32, #tpu.memory_space<vmem>>) attributes {dimension_semantics = [#tpu.dimension_semantics<parallel>, #tpu.dimension_semantics<parallel>], iteration_bounds = array<i64: 2, 1>, scalar_prefetch = 0 : i64, scratch_operands = 0 : i64, tpu.core_type = #tpu.core_type<tc>, window_params = [{transform_indices = @transform_0, window_bounds = array<i64: 1, 4, 256>}, {pipeline_mode = #tpu.pipeline_mode<synchronous>, transform_indices = @transform_1, window_bounds = array<i64: 4, 2>}, {pipeline_mode = #tpu.pipeline_mode<synchronous>, transform_indices = @transform_2, window_bounds = array<i64: 16, 4>}, {transform_indices = @transform_3, window_bounds = array<i64: 1, 16, 256>}, {transform_indices = @transform_4, window_bounds = array<i64: 1, 1, 2, 16>}]} {
    %cst = arith.constant 0.000000e+00 : f32
    %0 = vector.broadcast %cst : f32 to vector<16x1xf32>
    %cst_0 = arith.constant 0.000000e+00 : f32
    %1 = vector.broadcast %cst_0 : f32 to vector<16x1xf32>
    %c0 = arith.constant 0 : index
    %c0_1 = arith.constant 0 : index
    %c0_2 = arith.constant 0 : index
    %2 = vector.load %arg2[%c0, %c0_1, %c0_2] : memref<1x4x256xbf16, #tpu.memory_space<vmem>>, vector<1x4x256xbf16>
    %3 = vector.shape_cast %2 : vector<1x4x256xbf16> to vector<4x256xbf16>
    %4 = arith.extf %3 : vector<4x256xbf16> to vector<4x256xf32>
    %c0_3 = arith.constant 0 : index
    %c0_4 = arith.constant 0 : index
    %5 = vector.load %arg3[%c0_3, %c0_4] : memref<4x2xf32, #tpu.memory_space<vmem>>, vector<4x1xf32>
    %6 = vector.broadcast %5 : vector<4x1xf32> to vector<4x256xf32>
    %7 = arith.mulf %4, %6 : vector<4x256xf32>
    %c0_5 = arith.constant 0 : index
    %c1 = arith.constant 1 : index
    %8 = vector.load %arg3[%c0_5, %c1] : memref<4x2xf32, #tpu.memory_space<vmem>>, vector<4x1xf32>
    %9 = vector.broadcast %8 : vector<4x1xf32> to vector<4x256xf32>
    %10 = arith.addf %7, %9 : vector<4x256xf32>
    %cst_6 = arith.constant 0.000000e+00 : f32
    %11 = vector.broadcast %cst_6 : f32 to vector<4x256xf32>
    %12 = arith.maximumf %10, %11 : vector<4x256xf32>
    %c0_7 = arith.constant 0 : index
    %c0_8 = arith.constant 0 : index
    %13 = vector.load %arg4[%c0_7, %c0_8] : memref<16x4xbf16, #tpu.memory_space<vmem>>, vector<16x4xbf16>
    %14 = arith.truncf %12 : vector<4x256xf32> to vector<4x256xbf16>
    %cst_9 = arith.constant dense<0.000000e+00> : vector<16x256xf32>
    %15 = tpu.matmul %13, %14, %cst_9 {dimension_numbers = #tpu.dot_dimension_numbers<[1], [0], [0], [1], [0, 0, 1, 1], [], []>} : vector<16x4xbf16>, vector<4x256xbf16>, vector<16x256xf32> -> vector<16x256xf32>
    %16 = arith.truncf %15 : vector<16x256xf32> to vector<16x256xbf16>
    %c0_10 = arith.constant 0 : index
    %c0_11 = arith.constant 0 : index
    %c0_12 = arith.constant 0 : index
    %17 = vector.load %arg5[%c0_10, %c0_11, %c0_12] : memref<1x16x256xbf16, #tpu.memory_space<vmem>>, vector<1x16x256xbf16>
    %18 = vector.shape_cast %17 : vector<1x16x256xbf16> to vector<16x256xbf16>
    %19 = vector.shape_cast %16 : vector<16x256xbf16> to vector<1x16x256xbf16>
    tpu.vector_store %arg5[%c0_10, %c0_11, %c0_12], %19 {strides = array<i32>} : memref<1x16x256xbf16, #tpu.memory_space<vmem>>, vector<1x16x256xbf16>,
    %cst_13 = arith.constant dense<0.000000e+00> : vector<16xf32>
    %20 = vector.multi_reduction <add>, %15, %cst_13 [1] : vector<16x256xf32> to vector<16xf32>
    %21 = vector.shape_cast %20 : vector<16xf32> to vector<16x1xf32>
    %22 = arith.addf %0, %21 : vector<16x1xf32>
    %23 = arith.mulf %15, %15 : vector<16x256xf32>
    %cst_14 = arith.constant dense<0.000000e+00> : vector<16xf32>
    %24 = vector.multi_reduction <add>, %23, %cst_14 [1] : vector<16x256xf32> to vector<16xf32>
    %25 = vector.shape_cast %24 : vector<16xf32> to vector<16x1xf32>
    %26 = arith.addf %1, %25 : vector<16x1xf32>
    %27 = tpu.concatenate %22, %26 in 1 : vector<16x1xf32>, vector<16x1xf32> -> vector<16x2xf32>
    %28 = tpu.transpose %27, [1, 0] : vector<16x2xf32> -> vector<2x16xf32>
    %29 = vector.shape_cast %28 : vector<2x16xf32> to vector<1x1x2x16xf32>
    %c0_15 = arith.constant 0 : index
    %c0_16 = arith.constant 0 : index
    %c0_17 = arith.constant 0 : index
    %c0_18 = arith.constant 0 : index
    %30 = vector.load %arg6[%c0_15, %c0_16, %c0_17, %c0_18] : memref<1x1x2x16xf32, #tpu.memory_space<vmem>>, vector<1x1x2x16xf32>
    tpu.vector_store %arg6[%c0_15, %c0_16, %c0_17, %c0_18], %29 {strides = array<i32>} : memref<1x1x2x16xf32, #tpu.memory_space<vmem>>, vector<1x1x2x16xf32>,
    return
  }
  func.func @transform_0(%arg0: i32, %arg1: i32) -> (i32, i32, i32) {
    %c0_i32 = arith.constant 0 : i32
    %c0_i32_0 = arith.constant 0 : i32
    return %arg0, %c0_i32, %arg1 : i32, i32, i32
  }
  func.func @transform_1(%arg0: i32, %arg1: i32) -> (i32, i32) {
    %c0_i32 = arith.constant 0 : i32
    %c0_i32_0 = arith.constant 0 : i32
    %c0_i32_1 = arith.constant 0 : i32
    return %c0_i32, %c0_i32_0 : i32, i32
  }
  func.func @transform_2(%arg0: i32, %arg1: i32) -> (i32, i32) {
    %c0_i32 = arith.constant 0 : i32
    %c0_i32_0 = arith.constant 0 : i32
    %c0_i32_1 = arith.constant 0 : i32
    return %c0_i32, %c0_i32_0 : i32, i32
  }
  func.func @transform_3(%arg0: i32, %arg1: i32) -> (i32, i32, i32) {
    %c0_i32 = arith.constant 0 : i32
    %c0_i32_0 = arith.constant 0 : i32
    return %arg0, %c0_i32, %arg1 : i32, i32, i32
  }
  func.func @transform_4(%arg0: i32, %arg1: i32) -> (i32, i32, i32, i32) {
    %c0_i32 = arith.constant 0 : i32
    %c0_i32_0 = arith.constant 0 : i32
    %c0_i32_1 = arith.constant 0 : i32
    return %arg0, %arg1, %c0_i32, %c0_i32_0 : i32, i32, i32, i32
  }
}

module attributes {stable_mosaic.version = 11 : i64} {
  func.func @_bn_residual_relu_kernel(%arg0: i32, %arg1: i32, %arg2: memref<1x16x256xbf16, #tpu.memory_space<vmem>>, %arg3: memref<1x16x256xf32, #tpu.memory_space<vmem>>, %arg4: memref<16x2xf32, #tpu.memory_space<vmem>>, %arg5: memref<1x16x256xf32, #tpu.memory_space<vmem>>) attributes {dimension_semantics = [#tpu.dimension_semantics<parallel>, #tpu.dimension_semantics<parallel>], iteration_bounds = array<i64: 2, 1>, scalar_prefetch = 0 : i64, scratch_operands = 0 : i64, tpu.core_type = #tpu.core_type<tc>, window_params = [{transform_indices = @transform_0, window_bounds = array<i64: 1, 16, 256>}, {transform_indices = @transform_1, window_bounds = array<i64: 1, 16, 256>}, {pipeline_mode = #tpu.pipeline_mode<synchronous>, transform_indices = @transform_2, window_bounds = array<i64: 16, 2>}, {transform_indices = @transform_3, window_bounds = array<i64: 1, 16, 256>}]} {
    %c0 = arith.constant 0 : index
    %c0_0 = arith.constant 0 : index
    %c0_1 = arith.constant 0 : index
    %0 = vector.load %arg2[%c0, %c0_0, %c0_1] : memref<1x16x256xbf16, #tpu.memory_space<vmem>>, vector<1x16x256xbf16>
    %1 = arith.extf %0 : vector<1x16x256xbf16> to vector<1x16x256xf32>
    %c0_2 = arith.constant 0 : index
    %c0_3 = arith.constant 0 : index
    %2 = vector.load %arg4[%c0_2, %c0_3] : memref<16x2xf32, #tpu.memory_space<vmem>>, vector<16x1xf32>
    %3 = vector.shape_cast %2 : vector<16x1xf32> to vector<1x16x1xf32>
    %4 = vector.broadcast %3 : vector<1x16x1xf32> to vector<1x16x256xf32>
    %5 = arith.mulf %1, %4 : vector<1x16x256xf32>
    %c0_4 = arith.constant 0 : index
    %c1 = arith.constant 1 : index
    %6 = vector.load %arg4[%c0_4, %c1] : memref<16x2xf32, #tpu.memory_space<vmem>>, vector<16x1xf32>
    %7 = vector.shape_cast %6 : vector<16x1xf32> to vector<1x16x1xf32>
    %8 = vector.broadcast %7 : vector<1x16x1xf32> to vector<1x16x256xf32>
    %9 = arith.addf %5, %8 : vector<1x16x256xf32>
    %c0_5 = arith.constant 0 : index
    %c0_6 = arith.constant 0 : index
    %c0_7 = arith.constant 0 : index
    %10 = vector.load %arg3[%c0_5, %c0_6, %c0_7] : memref<1x16x256xf32, #tpu.memory_space<vmem>>, vector<1x16x256xf32>
    %11 = arith.addf %9, %10 : vector<1x16x256xf32>
    %cst = arith.constant 0.000000e+00 : f32
    %12 = vector.broadcast %cst : f32 to vector<1x16x256xf32>
    %13 = arith.maximumf %11, %12 : vector<1x16x256xf32>
    %c0_8 = arith.constant 0 : index
    %c0_9 = arith.constant 0 : index
    %c0_10 = arith.constant 0 : index
    %14 = vector.load %arg5[%c0_8, %c0_9, %c0_10] : memref<1x16x256xf32, #tpu.memory_space<vmem>>, vector<1x16x256xf32>
    tpu.vector_store %arg5[%c0_8, %c0_9, %c0_10], %13 {strides = array<i32>} : memref<1x16x256xf32, #tpu.memory_space<vmem>>, vector<1x16x256xf32>,
    return
  }
  func.func @transform_0(%arg0: i32, %arg1: i32) -> (i32, i32, i32) {
    %c0_i32 = arith.constant 0 : i32
    %c0_i32_0 = arith.constant 0 : i32
    return %arg0, %c0_i32, %arg1 : i32, i32, i32
  }
  func.func @transform_1(%arg0: i32, %arg1: i32) -> (i32, i32, i32) {
    %c0_i32 = arith.constant 0 : i32
    %c0_i32_0 = arith.constant 0 : i32
    return %arg0, %c0_i32, %arg1 : i32, i32, i32
  }
  func.func @transform_2(%arg0: i32, %arg1: i32) -> (i32, i32) {
    %c0_i32 = arith.constant 0 : i32
    %c0_i32_0 = arith.constant 0 : i32
    %c0_i32_1 = arith.constant 0 : i32
    return %c0_i32, %c0_i32_0 : i32, i32
  }
  func.func @transform_3(%arg0: i32, %arg1: i32) -> (i32, i32, i32) {
    %c0_i32 = arith.constant 0 : i32
    %c0_i32_0 = arith.constant 0 : i32
    return %arg0, %c0_i32, %arg1 : i32, i32, i32
  }
}

</mosaic_0001>

<llo_original>
// kernel: bottleneck_forward.6
$region0: #{bottleneck_forward.6}
  #allocation0 [shape = 'u32[]', space=smem, size = 0x4, offset = 0x4, fixed_abs, tag = 'smem constant byte address 0x4 - core index']
  #allocation1 [shape = 'u32[144,128]{1,0:T(1,128)}', space=vmem, size = 0x12000, scoped, tag = 'internal scratch']
  %s0 = inlined_call_operand.vmem [shape: bf16[2,4,256], index: 0, kind: input, shape index: {}]
  %s1 = inlined_call_operand.vmem [shape: f32[4,2], index: 1, kind: input, shape index: {}]
  %s2 = inlined_call_operand.vmem [shape: bf16[16,4], index: 2, kind: input, shape index: {}]
  %s3 = inlined_call_operand.vmem [shape: bf16[2,16,256], index: 3, kind: output, shape index: {0}]
  %s4 = inlined_call_operand.vmem [shape: f32[2,1,2,16], index: 4, kind: output, shape index: {1}]
  %5 = xla_tuple %s3, %s4
  %s6 = sld [smem:[#allocation0]]
  $region53: #{bottleneck_forward.6} parent=0
    _
  %s8 = ssub.s32 1, %s6
  %s9 = scalar_select 0, %s8, %s6
  loop: start=0, step=1, limit=4
  $region2: #{bottleneck_forward.6} parent=0 // loop_pre_header
    _
  $region3: #{bottleneck_forward.6} parent=0 // loop_header
    %s11 = sphi 0, %s15
    %p12 = scmp.ge.s32.totalorder %s11, 4
    %s18 = sphi 0, %s30
    %s19 = sphi 0, %s26
    %s20 = sphi 0, %s18
    %s21 = sphi 0, %s19
    %s22 = sphi 0, %s20
    %s23 = sphi 0, %s21
    %s35 = sphi 0, %s37
    %s38 = sphi 0, %s35
    %s39 = sphi 0, %s38
    %s55 = sphi 0, %s39
    %s59 = sphi 0, %s59
    %s61 = sphi 0, %s59
    %s62 = sphi 0, %s61
    %s76 = sphi 0, %s62
    %s80 = sphi 0, %s80
    %s82 = sphi 0, %s80
    %s83 = sphi 0, %s82
    %s97 = sphi 0, %s83
    %s105 = sphi 0, %s107
    %s108 = sphi 0, %s105
    %s109 = sphi 0, %s108
    %s125 = sphi 0, %s109
    %s133 = sphi 0, %s135
    %s136 = sphi 0, %s133
    %s137 = sphi 0, %s136
    %s153 = sphi 0, %s137
  $region4: #{bottleneck_forward.6} parent=0 // loop_header_branch
    %14 = sbr.rel (%p12) target = $region8
  $region5: #{bottleneck_forward.6} parent=0 // loop_body
    %s16 = ssub.s32 %s11, 1
    %s17 = ssub.s32 %s11, 2
    %s24 = sadd.s32 1, %s19
    %p25 = scmp.ge.s32.totalorder %s24, 1
    %s26 = scalar_select %p25, 0, %s24
    %s27 = sadd.s32 1, %s18
    %s28 = scalar_select %p25, %s27, %s18
    %p29 = scmp.ge.s32.totalorder %s28, 2
    %s30 = scalar_select %p29, 0, %s28
    %s31 = ssub.s32 %s18, %s30
    %s32 = ssub.s32 %s19, %s26
    %s33 = sor.u32 %s31, %s32
    %p34 = scmp.eq.s32.totalorder %s33, 0
    %s36 = sadd.s32 %s35, 1
    %s37 = scalar_select %p34, %s35, %s36
    %p40 = pneg %p34
    %p41 = scmp.eq.s32.totalorder %s11, 1
    %p42 = por %p40, %p41
    %p43 = scmp.ne.s32.totalorder %s35, %s38
    %p44 = scmp.eq.s32.totalorder %s11, 0
    %p45 = por %p43, %p44
    %p46 = scmp.ne.s32.totalorder %s35, %s38
    %p47 = scmp.eq.s32.totalorder %s16, 1
    %p48 = por %p46, %p47
    %p49 = scmp.ne.s32.totalorder %s38, %s39
    %p50 = scmp.eq.s32.totalorder %s16, 0
    %p51 = por %p49, %p50
    %p52 = scmp.ne.s32.totalorder %s38, %s39
    %p53 = scmp.eq.s32.totalorder %s17, 1
    %p54 = por %p52, %p53
    %p56 = scmp.ne.s32.totalorder %s39, %s55
    %p57 = scmp.eq.s32.totalorder %s17, 0
    %p58 = por %p56, %p57
    %s60 = sadd.s32 %s59, 1
    %p63 = scmp.eq.s32.totalorder %s11, 1
    %p64 = scmp.ne.s32.totalorder %s59, %s61
    %p65 = scmp.eq.s32.totalorder %s11, 0
    %p66 = por %p64, %p65
    %p67 = scmp.ne.s32.totalorder %s59, %s61
    %p68 = scmp.eq.s32.totalorder %s16, 1
    %p69 = por %p67, %p68
    %p70 = scmp.ne.s32.totalorder %s61, %s62
    %p71 = scmp.eq.s32.totalorder %s16, 0
    %p72 = por %p70, %p71
    %p73 = scmp.ne.s32.totalorder %s61, %s62
    %p74 = scmp.eq.s32.totalorder %s17, 1
    %p75 = por %p73, %p74
    %p77 = scmp.ne.s32.totalorder %s62, %s76
    %p78 = scmp.eq.s32.totalorder %s17, 0
    %p79 = por %p77, %p78
    %s81 = sadd.s32 %s80, 1
    %p84 = scmp.eq.s32.totalorder %s11, 1
    %p85 = scmp.ne.s32.totalorder %s80, %s82
    %p86 = scmp.eq.s32.totalorder %s11, 0
    %p87 = por %p85, %p86
    %p88 = scmp.ne.s32.totalorder %s80, %s82
    %p89 = scmp.eq.s32.totalorder %s16, 1
    %p90 = por %p88, %p89
    %p91 = scmp.ne.s32.totalorder %s82, %s83
    %p92 = scmp.eq.s32.totalorder %s16, 0
    %p93 = por %p91, %p92
    %p94 = scmp.ne.s32.totalorder %s82, %s83
    %p95 = scmp.eq.s32.totalorder %s17, 1
    %p96 = por %p94, %p95
    %p98 = scmp.ne.s32.totalorder %s83, %s97
    %p99 = scmp.eq.s32.totalorder %s17, 0
    %p100 = por %p98, %p99
    %s101 = ssub.s32 %s18, %s30
    %s102 = ssub.s32 %s19, %s26
    %s103 = sor.u32 %s101, %s102
    %p104 = scmp.eq.s32.totalorder %s103, 0
    %s106 = sadd.s32 %s105, 1
    %s107 = scalar_select %p104, %s105, %s106
    %p110 = pneg %p104
    %p111 = scmp.eq.s32.totalorder %s11, 1
    %p112 = por %p110, %p111
    %p113 = scmp.ne.s32.totalorder %s105, %s108
    %p114 = scmp.eq.s32.totalorder %s11, 0
    %p115 = por %p113, %p114
    %p116 = scmp.ne.s32.totalorder %s105, %s108
    %p117 = scmp.eq.s32.totalorder %s16, 1
    %p118 = por %p116, %p117
    %p119 = scmp.ne.s32.totalorder %s108, %s109
    %p120 = scmp.eq.s32.totalorder %s16, 0
    %p121 = por %p119, %p120
    %p122 = scmp.ne.s32.totalorder %s108, %s109
    %p123 = scmp.eq.s32.totalorder %s17, 1
    %p124 = por %p122, %p123
    %p126 = scmp.ne.s32.totalorder %s109, %s125
    %p127 = scmp.eq.s32.totalorder %s17, 0
    %p128 = por %p126, %p127
    %s129 = ssub.s32 %s18, %s30
    %s130 = ssub.s32 %s19, %s26
    %s131 = sor.u32 %s129, %s130
    %p132 = scmp.eq.s32.totalorder %s131, 0
    %s134 = sadd.s32 %s133, 1
    %s135 = scalar_select %p132, %s133, %s134
    %p138 = pneg %p132
    %p139 = scmp.eq.s32.totalorder %s11, 1
    %p140 = por %p138, %p139
    %p141 = scmp.ne.s32.totalorder %s133, %s136
    %p142 = scmp.eq.s32.totalorder %s11, 0
    %p143 = por %p141, %p142
    %p144 = scmp.ne.s32.totalorder %s133, %s136
    %p145 = scmp.eq.s32.totalorder %s16, 1
    %p146 = por %p144, %p145
    %p147 = scmp.ne.s32.totalorder %s136, %s137
    %p148 = scmp.eq.s32.totalorder %s16, 0
    %p149 = por %p147, %p148
    %p150 = scmp.ne.s32.totalorder %s136, %s137
    %p151 = scmp.eq.s32.totalorder %s17, 1
    %p152 = por %p150, %p151
    %p154 = scmp.ne.s32.totalorder %s137, %s153
    %p155 = scmp.eq.s32.totalorder %s17, 0
    %p156 = por %p154, %p155
    %p157 = scmp.le.s32.totalorder 1, %s11
    %p158 = scmp.lt.s32.totalorder %s11, 3
    %p159 = pnand %p157, %p158
    %p160 = pneg %p159
    // Predicated region
    $region9: #{bottleneck_forward.6} parent=5 // pred_check
      _
    $region10: #{bottleneck_forward.6} parent=5 // pred_check_branch
      %162 = sbr.rel (%p159) target = $region12
    $region11: #{bottleneck_forward.6} parent=5 // pred_region
      %s163 = ssub.s32 %s11, 1
      // Predicated region
      $region13: #{bottleneck_forward.6} parent=11 // pred_check
        %p164 = pneg %p72
      $region14: #{bottleneck_forward.6} parent=11 // pred_check_branch
        %166 = sbr.rel (%p164) target = $region16
      $region15: #{bottleneck_forward.6} parent=11 // pred_region
        _
      $region16: #{bottleneck_forward.6} parent=11 // pred_fallthru
        _
      // Predicated region
      $region17: #{bottleneck_forward.6} parent=11 // pred_check
        %p167 = pneg %p93
      $region18: #{bottleneck_forward.6} parent=11 // pred_check_branch
        %169 = sbr.rel (%p167) target = $region20
      $region19: #{bottleneck_forward.6} parent=11 // pred_region
        _
      $region20: #{bottleneck_forward.6} parent=11 // pred_fallthru
        _
    $region12: #{bottleneck_forward.6} parent=5 // pred_fallthru
      _
    %p170 = scmp.lt.s32.totalorder %s11, 2
    // Predicated region
    $region21: #{bottleneck_forward.6} parent=5 // pred_check
      %p171 = pneg %p170
    $region22: #{bottleneck_forward.6} parent=5 // pred_check_branch
      %173 = sbr.rel (%p171) target = $region24
    $region23: #{bottleneck_forward.6} parent=5 // pred_region
      // Predicated region
      $region25: #{bottleneck_forward.6} parent=23 // pred_check
        %p174 = pneg %p45
      $region26: #{bottleneck_forward.6} parent=23 // pred_check_branch
        %176 = sbr.rel (%p174) target = $region28
      $region27: #{bottleneck_forward.6} parent=23 // pred_region
        %s177 = smul.u32 2, %s19
        %p178 = scmp.lt.s32.totalorder %s18, 1
        %s179 = scalar_select %p178, %s18, 1
        %p180 = scmp.lt.s32.totalorder %s177, 1
        %s181 = scalar_select %p180, %s177, 1
        %s182 = smul.addr %s179, 2
        %s183 = sadd.s32 %s181, %s182
        %s184 = smul.addr %s183, 2
        %s185 = scalar_lea.vmem %s0, %s184
        %s186 = smul.u32 2, %s19
      $region28: #{bottleneck_forward.6} parent=23 // pred_fallthru
        _
    $region24: #{bottleneck_forward.6} parent=5 // pred_fallthru
      _
    %p187 = scmp.le.s32.totalorder 1, %s11
    %p188 = scmp.lt.s32.totalorder %s11, 3
    %p189 = pnand %p187, %p188
    %p190 = pneg %p189
    // Predicated region
    $region29: #{bottleneck_forward.6} parent=5 // pred_check
      _
    $region30: #{bottleneck_forward.6} parent=5 // pred_check_branch
      %192 = sbr.rel (%p189) target = $region32
    $region31: #{bottleneck_forward.6} parent=5 // pred_region
      %s193 = ssub.s32 %s11, 1
      %s194 = smul.u32 2, %s21
      %p195 = scmp.lt.s32.totalorder %s20, 1
      %s196 = scalar_select %p195, %s20, 1
      %p197 = scmp.lt.s32.totalorder %s194, 1
      %s198 = scalar_select %p197, %s194, 1
      %s199 = smul.addr %s196, 2
      %s200 = sadd.s32 %s198, %s199
      %s201 = smul.addr %s200, 2
      %s202 = scalar_lea.vmem %s0, %s201
      %p203 = pneg %p51
      %p204 = pneg %p48
      %p205 = pneg %p72
      %p206 = pneg %p69
      %p207 = pneg %p93
      %p208 = pneg %p90
      %p209 = pneg %p121
      %p210 = pneg %p118
      %s211 = smul.u32 2, %s21
      %p212 = scmp.lt.s32.totalorder %s20, 1
      %s213 = scalar_select %p212, %s20, 1
      %p214 = scmp.lt.s32.totalorder %s211, 1
      %s215 = scalar_select %p214, %s211, 1
      %s216 = smul.addr %s213, 4
      %s217 = sadd.s32 %s215, %s216
      %s218 = smul.addr %s217, 4
      %s219 = scalar_lea.vmem %s3, %s218
      %p220 = pneg %p149
      %p221 = pneg %p146
      %p222 = scmp.lt.s32.totalorder %s20, 1
      %s223 = scalar_select %p222, %s20, 1
      %p224 = scmp.lt.s32.totalorder %s21, 0
      %s225 = scalar_select %p224, %s21, 0
      %s226 = sadd.s32 %s225, %s223
      %s227 = smul.addr %s226, 2
      %s228 = scalar_lea.vmem %s4, %s227
      %s229 = smul.u32 2, %s21
      %p230 = scmp.lt.s32.totalorder %s20, 1
      %s231 = scalar_select %p230, %s20, 1
      %p232 = scmp.lt.s32.totalorder %s229, 1
      %s233 = scalar_select %p232, %s229, 1
      %s234 = smul.addr %s231, 2
      %s235 = sadd.s32 %s233, %s234
      %s236 = smul.addr %s235, 2
      %s237 = scalar_lea.vmem %s0, %s236
      %s238 = smul.u32 2, %s21
      %s239 = smul.u32 2, %s21
      %p240 = scmp.lt.s32.totalorder %s20, 1
      %s241 = scalar_select %p240, %s20, 1
      %p242 = scmp.lt.s32.totalorder %s239, 1
      %s243 = scalar_select %p242, %s239, 1
      %s244 = smul.addr %s241, 4
      %s245 = sadd.s32 %s243, %s244
      %s246 = smul.addr %s245, 4
      %s247 = scalar_lea.vmem %s3, %s246
      %s248 = smul.u32 2, %s21
      %p249 = scmp.lt.s32.totalorder %s20, 1
      %s250 = scalar_select %p249, %s20, 1
      %p251 = scmp.lt.s32.totalorder %s21, 0
      %s252 = scalar_select %p251, %s21, 0
      %s253 = sadd.s32 %s252, %s250
      %s254 = smul.addr %s253, 2
      %s255 = scalar_lea.vmem %s4, %s254
      %v257 = vld [vmem:[%s237] sm:$0xf]
      %v258 = vunpack.c.l.bf16 %v257
      %v259 = vld [vmem:[%s1] sm:$0xf]
      %261 = vset.pattern.permute.xlu0 0
      %262 = vperm.xlu0 %261, %v259
      %v263 = vpop.permute.xlu0 %262
      %v265 = vunpack.c.l.s4 839922192
      %v266 = vunpack.c.0.s8 %v265
      %v267 = vlaneseq
      %v268 = vshrl.u32 %v267, 7
      %v269 = vsub.s32 %v266, %v268
      %v270 = vrot.slane %v263, %v269
      %v272 = vmul.f32 %v258, %v270
      %273 = vset.pattern.permute.xlu0 1
      %274 = vperm.xlu0 %273, %v259
      %v275 = vpop.permute.xlu0 %274
      %v277 = vunpack.c.l.s4 839922192
      %v278 = vunpack.c.0.s8 %v277
      %v279 = vlaneseq
      %v280 = vshrl.u32 %v279, 7
      %v281 = vsub.s32 %v278, %v280
      %v282 = vrot.slane %v275, %v281
      %v284 = vadd.f32 %v272, %v282
      %v285 = vmax.f32 %v284, 0.0
      %v286 = vld [vmem:[%s2] sm:$0xf]
      %v287 = vld [vmem:[%s2 + $0x4] sm:$0xf]
      %v289 = vcombine.high %v285, %v285
      %v291 = vpack.c.bf16 %v285, %v285
      %v292 = vpack.c.bf16 %v289, %v289
      %v295 = vunpack.c.l.b16 %v286
      %v296 = vunpack.c.l.b16 %v287
      %v297 = vpack.c.b16 %v296, %v295
      %vm298 = vcmask 31744
      %v300 = vsel %vm298, %v297, 0
      %vm302 = vcmask 1041408
      %v304 = vsel %vm302, %v291, 0
      %v307 = vsel %vm302, %v292, 0
      %309 = vmatprep.subr.bf16.mxu0 %v307
      %310 = vmatpush1.bf16.msra.mxu0 %v304
      %311 = vmatprep.subr.bf16.mxu0 0
      %312 = vmatpush1.bf16.msra.mxu0 0
      %313 = vmatprep.subr.bf16.mxu0 0
      %314 = vmatpush1.bf16.msra.mxu0 0
      %315 = vmatprep.subr.bf16.mxu0 0
      %316 = vmatpush1.bf16.msra.mxu0 0
      %317 = vmatprep.subr.bf16.mxu0 0
      %318 = vmatpush1.bf16.msra.mxu0 0
      %319 = vmatprep.subr.bf16.mxu0 0
      %320 = vmatpush1.bf16.msra.mxu0 0
      %321 = vmatprep.subr.bf16.mxu0 0
      %322 = vmatpush1.bf16.msra.mxu0 0
      %323 = vmatprep.subr.bf16.mxu0 0
      %324 = vmatpush1.bf16.msra.mxu0 0
      %325 = vmatprep.subr.bf16.mxu0 0
      %326 = vmatpush1.bf16.msra.mxu0 0
      %327 = vmatprep.subr.bf16.mxu0 0
      %328 = vmatpush1.bf16.msra.mxu0 0
      %329 = vmatprep.subr.bf16.mxu0 0
      %330 = vmatpush1.bf16.msra.mxu0 0
      %331 = vmatprep.subr.bf16.mxu0 0
      %332 = vmatpush1.bf16.msra.mxu0 0
      %333 = vmatprep.subr.bf16.mxu0 0
      %334 = vmatpush1.bf16.msra.mxu0 0
      %335 = vmatprep.subr.bf16.mxu0 0
      %336 = vmatpush1.bf16.msra.mxu0 0
      %337 = vmatprep.subr.bf16.mxu0 0
      %338 = vmatpush1.bf16.msra.mxu0 0
      %339 = vmatprep.subr.bf16.mxu0 0
      %340 = vmatpush1.bf16.msra.mxu0 0
      %341 = vmatprep.mubr.bf16.mxu0 0
      %342 = vmatmul.mubr.bf16.gmra.mrb[0].mxu0 %v300
      %v343 = vpop.f32.mrb[0].mxu0
      %v344 = vadd.f32 0.0, %v343
      %v345 = vpop.f32.mrb[0].mxu0
      %v346 = vadd.f32 0.0, %v345
      %v347 = vpop.f32.mrb[0].mxu0
      %v348 = vadd.f32 0.0, %v347
      %v349 = vpop.f32.mrb[0].mxu0
      %v350 = vadd.f32 0.0, %v349
      %351 = vdwg.mxu0
      %v352 = vpack.c.bf16 %v348, %v344
      %v353 = vpack.c.bf16 %v350, %v346
      %v356 = vunpack.c.l.b16 %v352
      %v357 = vunpack.c.l.b16 %v353
      %v358 = vunpack.c.h.b16 %v352
      %v359 = vunpack.c.h.b16 %v353
      %v360 = vpack.c.b16 %v357, %v356
      %v361 = vpack.c.b16 %v359, %v358
      %364 = vst [vmem:[%s247] sm:$0xff] %v360
      %365 = vst [vmem:[%s247 + $0x8] sm:$0xff] %v361
      %v366 = vadd.f32 %v344, %v346
      %367 = vadd.xlane.f32.xlu0 %v366
      %v368 = vpop.xlane.xlu0 %367
      %v369 = vadd.f32 %v348, %v350
      %370 = vadd.xlane.f32.xlu0 %v369
      %v371 = vpop.xlane.xlu0 %370
      %v372 = vadd.f32 %v368, 0.0
      %v373 = vadd.f32 %v371, 0.0
      %v374 = vmul.f32 %v344, %v344
      %v375 = vmul.f32 %v346, %v346
      %v376 = vmul.f32 %v348, %v348
      %v377 = vmul.f32 %v350, %v350
      %v378 = vadd.f32 %v374, %v375
      %379 = vadd.xlane.f32.xlu0 %v378
      %v380 = vpop.xlane.xlu0 %379
      %v381 = vadd.f32 %v376, %v377
      %382 = vadd.xlane.f32.xlu0 %v381
      %v383 = vpop.xlane.xlu0 %382
      %v384 = vadd.f32 %v380, 0.0
      %v385 = vadd.f32 %v383, 0.0
      %vm386 = vcmask 7168
      %v387 = vsel %vm386, %v372, %v384
      %v388 = vsel %vm386, %v373, %v385
      %389 = vxpose.xlu0.b32.start [1/16] %v387, 128
      %390 = vxpose.xlu0.b32.cont [2/16] %v388, 128
      %391 = vxpose.xlu0.b32.cont [3/16] 0.0, 128
      %392 = vxpose.xlu0.b32.cont [4/16] 0.0, 128
      %393 = vxpose.xlu0.b32.cont [5/16] 0.0, 128
      %394 = vxpose.xlu0.b32.cont [6/16] 0.0, 128
      %395 = vxpose.xlu0.b32.cont [7/16] 0.0, 128
      %396 = vxpose.xlu0.b32.cont [8/16] 0.0, 128
      %397 = vxpose.xlu0.b32.cont [9/16] 0.0, 128
      %398 = vxpose.xlu0.b32.cont [10/16] 0.0, 128
      %399 = vxpose.xlu0.b32.cont [11/16] 0.0, 128
      %400 = vxpose.xlu0.b32.cont [12/16] 0.0, 128
      %401 = vxpose.xlu0.b32.cont [13/16] 0.0, 128
      %402 = vxpose.xlu0.b32.cont [14/16] 0.0, 128
      %403 = vxpose.xlu0.b32.cont [15/16] 0.0, 128
      %404 = vxpose.xlu0.b32.end [16/16] 0.0, 128
      %v405 = vpop.trf.xlu0
      %v406 = vpop.trf.xlu0
      %v407 = vpop.trf.xlu0
      %v408 = vpop.trf.xlu0
      %v409 = vpop.trf.xlu0
      %v410 = vpop.trf.xlu0
      %v411 = vpop.trf.xlu0
      %v412 = vpop.trf.xlu0
      %v413 = vpop.trf.xlu0
      %v414 = vpop.trf.xlu0
      %v415 = vpop.trf.xlu0
      %v416 = vpop.trf.xlu0
      %v417 = vpop.trf.xlu0
      %v418 = vpop.trf.xlu0
      %v419 = vpop.trf.xlu0
      %v420 = vpop.trf.xlu0
      %vm421 = vcmask 123904
      %422 = vst.msk [vmem:[%s255] sm:$0x3] %vm421, %v405
      %s423 = smul.u32 2, %s21
      %p424 = scmp.lt.s32.totalorder %s20, 1
      %s425 = scalar_select %p424, %s20, 1
      %p426 = scmp.lt.s32.totalorder %s423, 1
      %s427 = scalar_select %p426, %s423, 1
      %s428 = smul.addr %s425, 4
      %s429 = sadd.s32 %s427, %s428
      %s430 = smul.addr %s429, 4
      %s431 = scalar_lea.vmem %s3, %s430
      %p432 = scmp.lt.s32.totalorder %s20, 1
      %s433 = scalar_select %p432, %s20, 1
      %p434 = scmp.lt.s32.totalorder %s21, 0
      %s435 = scalar_select %p434, %s21, 0
      %s436 = sadd.s32 %s435, %s433
      %s437 = smul.addr %s436, 2
      %s438 = scalar_lea.vmem %s4, %s437
      // Predicated region
      $region33: #{bottleneck_forward.6} parent=31 // pred_check
        %p439 = pneg %p118
      $region34: #{bottleneck_forward.6} parent=31 // pred_check_branch
        %441 = sbr.rel (%p439) target = $region36
      $region35: #{bottleneck_forward.6} parent=31 // pred_region
        %s442 = smul.u32 2, %s21
      $region36: #{bottleneck_forward.6} parent=31 // pred_fallthru
        _
      // Predicated region
      $region37: #{bottleneck_forward.6} parent=31 // pred_check
        %p443 = pneg %p146
      $region38: #{bottleneck_forward.6} parent=31 // pred_check_branch
        %445 = sbr.rel (%p443) target = $region40
      $region39: #{bottleneck_forward.6} parent=31 // pred_region
        _
      $region40: #{bottleneck_forward.6} parent=31 // pred_fallthru
        _
    $region32: #{bottleneck_forward.6} parent=5 // pred_fallthru
      _
    %p446 = scmp.le.s32.totalorder 2, %s11
    // Predicated region
    $region41: #{bottleneck_forward.6} parent=5 // pred_check
      %p447 = pneg %p446
    $region42: #{bottleneck_forward.6} parent=5 // pred_check_branch
      %449 = sbr.rel (%p447) target = $region44
    $region43: #{bottleneck_forward.6} parent=5 // pred_region
      %s450 = ssub.s32 %s11, 2
      // Predicated region
      $region45: #{bottleneck_forward.6} parent=43 // pred_check
        %p451 = pneg %p124
      $region46: #{bottleneck_forward.6} parent=43 // pred_check_branch
        %453 = sbr.rel (%p451) target = $region48
      $region47: #{bottleneck_forward.6} parent=43 // pred_region
        %s454 = smul.u32 2, %s23
        %p455 = scmp.lt.s32.totalorder %s22, 1
        %s456 = scalar_select %p455, %s22, 1
        %p457 = scmp.lt.s32.totalorder %s454, 1
        %s458 = scalar_select %p457, %s454, 1
        %s459 = smul.addr %s456, 4
        %s460 = sadd.s32 %s458, %s459
        %s461 = smul.addr %s460, 4
        %s462 = scalar_lea.vmem %s3, %s461
      $region48: #{bottleneck_forward.6} parent=43 // pred_fallthru
        _
      // Predicated region
      $region49: #{bottleneck_forward.6} parent=43 // pred_check
        %p463 = pneg %p152
      $region50: #{bottleneck_forward.6} parent=43 // pred_check_branch
        %465 = sbr.rel (%p463) target = $region52
      $region51: #{bottleneck_forward.6} parent=43 // pred_region
        %p466 = scmp.lt.s32.totalorder %s22, 1
        %s467 = scalar_select %p466, %s22, 1
        %p468 = scmp.lt.s32.totalorder %s23, 0
        %s469 = scalar_select %p468, %s23, 0
        %s470 = sadd.s32 %s469, %s467
        %s471 = smul.addr %s470, 2
        %s472 = scalar_lea.vmem %s4, %s471
      $region52: #{bottleneck_forward.6} parent=43 // pred_fallthru
        _
    $region44: #{bottleneck_forward.6} parent=5 // pred_fallthru
      _
  $region6: #{bottleneck_forward.6} parent=0 // loop_footer
    %s15 = sadd.s32 1, %s11
  $region7: #{bottleneck_forward.6} parent=0 // loop_footer_branch
    %10 = sbr.rel target = $region3
  $region8: #{bottleneck_forward.6} parent=0 // loop_exit
    _

// kernel: bottleneck_forward.4
$region0: #{bottleneck_forward.4}
  #allocation0 [shape = 'u32[]', space=smem, size = 0x4, offset = 0x4, fixed_abs, tag = 'smem constant byte address 0x4 - core index']
  #allocation1 [shape = 'u32[144,128]{1,0:T(1,128)}', space=vmem, size = 0x12000, scoped, tag = 'internal scratch']
  %s0 = inlined_call_operand.vmem [shape: f32[2,16,256], index: 0, kind: input, shape index: {}]
  %s1 = inlined_call_operand.vmem [shape: bf16[4,16], index: 1, kind: input, shape index: {}]
  %s2 = inlined_call_operand.vmem [shape: bf16[2,4,256], index: 2, kind: output, shape index: {0}]
  %s3 = inlined_call_operand.vmem [shape: f32[2,1,2,4], index: 3, kind: output, shape index: {1}]
  %4 = xla_tuple %s2, %s3
  %s5 = sld [smem:[#allocation0]]
  $region49: #{bottleneck_forward.4} parent=0
    _
  %s7 = ssub.s32 1, %s5
  %s8 = scalar_select 0, %s7, %s5
  loop: start=0, step=1, limit=4
  $region2: #{bottleneck_forward.4} parent=0 // loop_pre_header
    _
  $region3: #{bottleneck_forward.4} parent=0 // loop_header
    %s10 = sphi 0, %s14
    %p11 = scmp.ge.s32.totalorder %s10, 4
    %s17 = sphi 0, %s29
    %s18 = sphi 0, %s25
    %s19 = sphi 0, %s17
    %s20 = sphi 0, %s18
    %s21 = sphi 0, %s19
    %s22 = sphi 0, %s20
    %s34 = sphi 0, %s36
    %s37 = sphi 0, %s34
    %s38 = sphi 0, %s37
    %s54 = sphi 0, %s38
    %s58 = sphi 0, %s58
    %s60 = sphi 0, %s58
    %s61 = sphi 0, %s60
    %s75 = sphi 0, %s61
    %s83 = sphi 0, %s85
    %s86 = sphi 0, %s83
    %s87 = sphi 0, %s86
    %s103 = sphi 0, %s87
    %s111 = sphi 0, %s113
    %s114 = sphi 0, %s111
    %s115 = sphi 0, %s114
    %s131 = sphi 0, %s115
  $region4: #{bottleneck_forward.4} parent=0 // loop_header_branch
    %13 = sbr.rel (%p11) target = $region8
  $region5: #{bottleneck_forward.4} parent=0 // loop_body
    %s15 = ssub.s32 %s10, 1
    %s16 = ssub.s32 %s10, 2
    %s23 = sadd.s32 1, %s18
    %p24 = scmp.ge.s32.totalorder %s23, 1
    %s25 = scalar_select %p24, 0, %s23
    %s26 = sadd.s32 1, %s17
    %s27 = scalar_select %p24, %s26, %s17
    %p28 = scmp.ge.s32.totalorder %s27, 2
    %s29 = scalar_select %p28, 0, %s27
    %s30 = ssub.s32 %s17, %s29
    %s31 = ssub.s32 %s18, %s25
    %s32 = sor.u32 %s30, %s31
    %p33 = scmp.eq.s32.totalorder %s32, 0
    %s35 = sadd.s32 %s34, 1
    %s36 = scalar_select %p33, %s34, %s35
    %p39 = pneg %p33
    %p40 = scmp.eq.s32.totalorder %s10, 1
    %p41 = por %p39, %p40
    %p42 = scmp.ne.s32.totalorder %s34, %s37
    %p43 = scmp.eq.s32.totalorder %s10, 0
    %p44 = por %p42, %p43
    %p45 = scmp.ne.s32.totalorder %s34, %s37
    %p46 = scmp.eq.s32.totalorder %s15, 1
    %p47 = por %p45, %p46
    %p48 = scmp.ne.s32.totalorder %s37, %s38
    %p49 = scmp.eq.s32.totalorder %s15, 0
    %p50 = por %p48, %p49
    %p51 = scmp.ne.s32.totalorder %s37, %s38
    %p52 = scmp.eq.s32.totalorder %s16, 1
    %p53 = por %p51, %p52
    %p55 = scmp.ne.s32.totalorder %s38, %s54
    %p56 = scmp.eq.s32.totalorder %s16, 0
    %p57 = por %p55, %p56
    %s59 = sadd.s32 %s58, 1
    %p62 = scmp.eq.s32.totalorder %s10, 1
    %p63 = scmp.ne.s32.totalorder %s58, %s60
    %p64 = scmp.eq.s32.totalorder %s10, 0
    %p65 = por %p63, %p64
    %p66 = scmp.ne.s32.totalorder %s58, %s60
    %p67 = scmp.eq.s32.totalorder %s15, 1
    %p68 = por %p66, %p67
    %p69 = scmp.ne.s32.totalorder %s60, %s61
    %p70 = scmp.eq.s32.totalorder %s15, 0
    %p71 = por %p69, %p70
    %p72 = scmp.ne.s32.totalorder %s60, %s61
    %p73 = scmp.eq.s32.totalorder %s16, 1
    %p74 = por %p72, %p73
    %p76 = scmp.ne.s32.totalorder %s61, %s75
    %p77 = scmp.eq.s32.totalorder %s16, 0
    %p78 = por %p76, %p77
    %s79 = ssub.s32 %s17, %s29
    %s80 = ssub.s32 %s18, %s25
    %s81 = sor.u32 %s79, %s80
    %p82 = scmp.eq.s32.totalorder %s81, 0
    %s84 = sadd.s32 %s83, 1
    %s85 = scalar_select %p82, %s83, %s84
    %p88 = pneg %p82
    %p89 = scmp.eq.s32.totalorder %s10, 1
    %p90 = por %p88, %p89
    %p91 = scmp.ne.s32.totalorder %s83, %s86
    %p92 = scmp.eq.s32.totalorder %s10, 0
    %p93 = por %p91, %p92
    %p94 = scmp.ne.s32.totalorder %s83, %s86
    %p95 = scmp.eq.s32.totalorder %s15, 1
    %p96 = por %p94, %p95
    %p97 = scmp.ne.s32.totalorder %s86, %s87
    %p98 = scmp.eq.s32.totalorder %s15, 0
    %p99 = por %p97, %p98
    %p100 = scmp.ne.s32.totalorder %s86, %s87
    %p101 = scmp.eq.s32.totalorder %s16, 1
    %p102 = por %p100, %p101
    %p104 = scmp.ne.s32.totalorder %s87, %s103
    %p105 = scmp.eq.s32.totalorder %s16, 0
    %p106 = por %p104, %p105
    %s107 = ssub.s32 %s17, %s29
    %s108 = ssub.s32 %s18, %s25
    %s109 = sor.u32 %s107, %s108
    %p110 = scmp.eq.s32.totalorder %s109, 0
    %s112 = sadd.s32 %s111, 1
    %s113 = scalar_select %p110, %s111, %s112
    %p116 = pneg %p110
    %p117 = scmp.eq.s32.totalorder %s10, 1
    %p118 = por %p116, %p117
    %p119 = scmp.ne.s32.totalorder %s111, %s114
    %p120 = scmp.eq.s32.totalorder %s10, 0
    %p121 = por %p119, %p120
    %p122 = scmp.ne.s32.totalorder %s111, %s114
    %p123 = scmp.eq.s32.totalorder %s15, 1
    %p124 = por %p122, %p123
    %p125 = scmp.ne.s32.totalorder %s114, %s115
    %p126 = scmp.eq.s32.totalorder %s15, 0
    %p127 = por %p125, %p126
    %p128 = scmp.ne.s32.totalorder %s114, %s115
    %p129 = scmp.eq.s32.totalorder %s16, 1
    %p130 = por %p128, %p129
    %p132 = scmp.ne.s32.totalorder %s115, %s131
    %p133 = scmp.eq.s32.totalorder %s16, 0
    %p134 = por %p132, %p133
    %p135 = scmp.le.s32.totalorder 1, %s10
    %p136 = scmp.lt.s32.totalorder %s10, 3
    %p137 = pnand %p135, %p136
    %p138 = pneg %p137
    // Predicated region
    $region9: #{bottleneck_forward.4} parent=5 // pred_check
      _
    $region10: #{bottleneck_forward.4} parent=5 // pred_check_branch
      %140 = sbr.rel (%p137) target = $region12
    $region11: #{bottleneck_forward.4} parent=5 // pred_region
      %s141 = ssub.s32 %s10, 1
      // Predicated region
      $region13: #{bottleneck_forward.4} parent=11 // pred_check
        %p142 = pneg %p71
      $region14: #{bottleneck_forward.4} parent=11 // pred_check_branch
        %144 = sbr.rel (%p142) target = $region16
      $region15: #{bottleneck_forward.4} parent=11 // pred_region
        _
      $region16: #{bottleneck_forward.4} parent=11 // pred_fallthru
        _
    $region12: #{bottleneck_forward.4} parent=5 // pred_fallthru
      _
    %p145 = scmp.lt.s32.totalorder %s10, 2
    // Predicated region
    $region17: #{bottleneck_forward.4} parent=5 // pred_check
      %p146 = pneg %p145
    $region18: #{bottleneck_forward.4} parent=5 // pred_check_branch
      %148 = sbr.rel (%p146) target = $region20
    $region19: #{bottleneck_forward.4} parent=5 // pred_region
      // Predicated region
      $region21: #{bottleneck_forward.4} parent=19 // pred_check
        %p149 = pneg %p44
      $region22: #{bottleneck_forward.4} parent=19 // pred_check_branch
        %151 = sbr.rel (%p149) target = $region24
      $region23: #{bottleneck_forward.4} parent=19 // pred_region
        %s152 = smul.u32 2, %s18
        %p153 = scmp.lt.s32.totalorder %s17, 1
        %s154 = scalar_select %p153, %s17, 1
        %p155 = scmp.lt.s32.totalorder %s152, 1
        %s156 = scalar_select %p155, %s152, 1
        %s157 = smul.addr %s154, 4
        %s158 = sadd.s32 %s156, %s157
        %s159 = smul.addr %s158, 8
        %s160 = scalar_lea.vmem %s0, %s159
        %s161 = smul.u32 2, %s18
      $region24: #{bottleneck_forward.4} parent=19 // pred_fallthru
        _
    $region20: #{bottleneck_forward.4} parent=5 // pred_fallthru
      _
    %p162 = scmp.le.s32.totalorder 1, %s10
    %p163 = scmp.lt.s32.totalorder %s10, 3
    %p164 = pnand %p162, %p163
    %p165 = pneg %p164
    // Predicated region
    $region25: #{bottleneck_forward.4} parent=5 // pred_check
      _
    $region26: #{bottleneck_forward.4} parent=5 // pred_check_branch
      %167 = sbr.rel (%p164) target = $region28
    $region27: #{bottleneck_forward.4} parent=5 // pred_region
      %s168 = ssub.s32 %s10, 1
      %s169 = smul.u32 2, %s20
      %p170 = scmp.lt.s32.totalorder %s19, 1
      %s171 = scalar_select %p170, %s19, 1
      %p172 = scmp.lt.s32.totalorder %s169, 1
      %s173 = scalar_select %p172, %s169, 1
      %s174 = smul.addr %s171, 4
      %s175 = sadd.s32 %s173, %s174
      %s176 = smul.addr %s175, 8
      %s177 = scalar_lea.vmem %s0, %s176
      %p178 = pneg %p50
      %p179 = pneg %p47
      %p180 = pneg %p71
      %p181 = pneg %p68
      %p182 = pneg %p99
      %p183 = pneg %p96
      %s184 = smul.u32 2, %s20
      %p185 = scmp.lt.s32.totalorder %s19, 1
      %s186 = scalar_select %p185, %s19, 1
      %p187 = scmp.lt.s32.totalorder %s184, 1
      %s188 = scalar_select %p187, %s184, 1
      %s189 = smul.addr %s186, 2
      %s190 = sadd.s32 %s188, %s189
      %s191 = smul.addr %s190, 2
      %s192 = scalar_lea.vmem %s2, %s191
      %p193 = pneg %p127
      %p194 = pneg %p124
      %p195 = scmp.lt.s32.totalorder %s19, 1
      %s196 = scalar_select %p195, %s19, 1
      %p197 = scmp.lt.s32.totalorder %s20, 0
      %s198 = scalar_select %p197, %s20, 0
      %s199 = sadd.s32 %s198, %s196
      %s200 = smul.addr %s199, 2
      %s201 = scalar_lea.vmem %s3, %s200
      %s202 = smul.u32 2, %s20
      %p203 = scmp.lt.s32.totalorder %s19, 1
      %s204 = scalar_select %p203, %s19, 1
      %p205 = scmp.lt.s32.totalorder %s202, 1
      %s206 = scalar_select %p205, %s202, 1
      %s207 = smul.addr %s204, 4
      %s208 = sadd.s32 %s206, %s207
      %s209 = smul.addr %s208, 8
      %s210 = scalar_lea.vmem %s0, %s209
      %s211 = smul.u32 2, %s20
      %s212 = smul.u32 2, %s20
      %p213 = scmp.lt.s32.totalorder %s19, 1
      %s214 = scalar_select %p213, %s19, 1
      %p215 = scmp.lt.s32.totalorder %s212, 1
      %s216 = scalar_select %p215, %s212, 1
      %s217 = smul.addr %s214, 2
      %s218 = sadd.s32 %s216, %s217
      %s219 = smul.addr %s218, 2
      %s220 = scalar_lea.vmem %s2, %s219
      %s221 = smul.u32 2, %s20
      %p222 = scmp.lt.s32.totalorder %s19, 1
      %s223 = scalar_select %p222, %s19, 1
      %p224 = scmp.lt.s32.totalorder %s20, 0
      %s225 = scalar_select %p224, %s20, 0
      %s226 = sadd.s32 %s225, %s223
      %s227 = smul.addr %s226, 2
      %s228 = scalar_lea.vmem %s3, %s227
      %v230 = vld [vmem:[%s1] sm:$0x3]
      %v231 = vld [vmem:[%s210] sm:$0xff]
      %v232 = vld [vmem:[%s210 + $0x8] sm:$0xff]
      %v233 = vld [vmem:[%s210 + $0x10] sm:$0xff]
      %v234 = vld [vmem:[%s210 + $0x18] sm:$0xff]
      %v235 = vpack.c.bf16 %v233, %v231
      %v236 = vpack.c.bf16 %v234, %v232
      %vm237 = vcmask 130048
      %v239 = vsel %vm237, %v230, 0
      %241 = vmatprep.subr.bf16.mxu0 %v236
      %242 = vmatpush1.bf16.msra.mxu0 %v235
      %243 = vmatprep.subr.bf16.mxu0 0
      %244 = vmatpush1.bf16.msra.mxu0 0
      %245 = vmatprep.subr.bf16.mxu0 0
      %246 = vmatpush1.bf16.msra.mxu0 0
      %247 = vmatprep.subr.bf16.mxu0 0
      %248 = vmatpush1.bf16.msra.mxu0 0
      %249 = vmatprep.subr.bf16.mxu0 0
      %250 = vmatpush1.bf16.msra.mxu0 0
      %251 = vmatprep.subr.bf16.mxu0 0
      %252 = vmatpush1.bf16.msra.mxu0 0
      %253 = vmatprep.subr.bf16.mxu0 0
      %254 = vmatpush1.bf16.msra.mxu0 0
      %255 = vmatprep.subr.bf16.mxu0 0
      %256 = vmatpush1.bf16.msra.mxu0 0
      %257 = vmatprep.subr.bf16.mxu0 0
      %258 = vmatpush1.bf16.msra.mxu0 0
      %259 = vmatprep.subr.bf16.mxu0 0
      %260 = vmatpush1.bf16.msra.mxu0 0
      %261 = vmatprep.subr.bf16.mxu0 0
      %262 = vmatpush1.bf16.msra.mxu0 0
      %263 = vmatprep.subr.bf16.mxu0 0
      %264 = vmatpush1.bf16.msra.mxu0 0
      %265 = vmatprep.subr.bf16.mxu0 0
      %266 = vmatpush1.bf16.msra.mxu0 0
      %267 = vmatprep.subr.bf16.mxu0 0
      %268 = vmatpush1.bf16.msra.mxu0 0
      %269 = vmatprep.subr.bf16.mxu0 0
      %270 = vmatpush1.bf16.msra.mxu0 0
      %271 = vmatprep.subr.bf16.mxu0 0
      %272 = vmatpush1.bf16.msra.mxu0 0
      %273 = vmatprep.mubr.bf16.mxu0 0
      %274 = vmatmul.mubr.bf16.gmra.mrb[0].mxu0 %v239
      %v275 = vpop.f32.mrb[0].mxu0
      %v276 = vadd.f32 0.0, %v275
      %v277 = vpop.f32.mrb[0].mxu0
      %v278 = vadd.f32 0.0, %v277
      %v279 = vpop.f32.mrb[0].mxu0
      %v280 = vpop.f32.mrb[0].mxu0
      %281 = vdwg.mxu0
      %v282 = vpack.c.bf16 %v276, %v276
      %v283 = vpack.c.bf16 %v278, %v278
      %v286 = vcombine.low %v282, %v283
      %v288 = vunpack.c.l.s4 1983009808
      %v289 = vunpack.c.0.s8 %v288
      %v290 = vlaneseq
      %v291 = vshrl.u32 %v290, 7
      %v292 = vsub.s32 %v289, %v291
      %v293 = vrot.slane %v286, %v292
      %295 = vst [vmem:[%s220] sm:$0xf] %v293
      %vm296 = vcmask 1043456
      %v297 = vsel %vm296, %v276, 0.0
      %v298 = vsel %vm296, %v278, 0.0
      %v299 = vadd.f32 %v297, %v298
      %300 = vadd.xlane.f32.xlu0 %v299
      %v301 = vpop.xlane.xlu0 %300
      %v302 = vadd.f32 %v301, 0.0
      %v303 = vmul.f32 %v276, %v276
      %v304 = vmul.f32 %v278, %v278
      %v305 = vsel %vm296, %v303, 0.0
      %v306 = vsel %vm296, %v304, 0.0
      %v307 = vadd.f32 %v305, %v306
      %308 = vadd.xlane.f32.xlu0 %v307
      %v309 = vpop.xlane.xlu0 %308
      %v310 = vadd.f32 %v309, 0.0
      %vm311 = vcmask 7168
      %v312 = vsel %vm311, %v302, %v310
      %313 = vxpose.xlu0.b32.start [1/16] %v312, 128
      %314 = vxpose.xlu0.b32.cont [2/16] 0.0, 128
      %315 = vxpose.xlu0.b32.cont [3/16] 0.0, 128
      %316 = vxpose.xlu0.b32.cont [4/16] 0.0, 128
      %317 = vxpose.xlu0.b32.cont [5/16] 0.0, 128
      %318 = vxpose.xlu0.b32.cont [6/16] 0.0, 128
      %319 = vxpose.xlu0.b32.cont [7/16] 0.0, 128
      %320 = vxpose.xlu0.b32.cont [8/16] 0.0, 128
      %321 = vxpose.xlu0.b32.cont [9/16] 0.0, 128
      %322 = vxpose.xlu0.b32.cont [10/16] 0.0, 128
      %323 = vxpose.xlu0.b32.cont [11/16] 0.0, 128
      %324 = vxpose.xlu0.b32.cont [12/16] 0.0, 128
      %325 = vxpose.xlu0.b32.cont [13/16] 0.0, 128
      %326 = vxpose.xlu0.b32.cont [14/16] 0.0, 128
      %327 = vxpose.xlu0.b32.cont [15/16] 0.0, 128
      %328 = vxpose.xlu0.b32.end [16/16] 0.0, 128
      %v329 = vpop.trf.xlu0
      %v330 = vpop.trf.xlu0
      %v331 = vpop.trf.xlu0
      %v332 = vpop.trf.xlu0
      %v333 = vpop.trf.xlu0
      %v334 = vpop.trf.xlu0
      %v335 = vpop.trf.xlu0
      %v336 = vpop.trf.xlu0
      %v337 = vpop.trf.xlu0
      %v338 = vpop.trf.xlu0
      %v339 = vpop.trf.xlu0
      %v340 = vpop.trf.xlu0
      %v341 = vpop.trf.xlu0
      %v342 = vpop.trf.xlu0
      %v343 = vpop.trf.xlu0
      %v344 = vpop.trf.xlu0
      %vm345 = vcmask 25600
      %346 = vst.msk [vmem:[%s228] sm:$0x3] %vm345, %v329
      %s347 = smul.u32 2, %s20
      %p348 = scmp.lt.s32.totalorder %s19, 1
      %s349 = scalar_select %p348, %s19, 1
      %p350 = scmp.lt.s32.totalorder %s347, 1
      %s351 = scalar_select %p350, %s347, 1
      %s352 = smul.addr %s349, 2
      %s353 = sadd.s32 %s351, %s352
      %s354 = smul.addr %s353, 2
      %s355 = scalar_lea.vmem %s2, %s354
      %p356 = scmp.lt.s32.totalorder %s19, 1
      %s357 = scalar_select %p356, %s19, 1
      %p358 = scmp.lt.s32.totalorder %s20, 0
      %s359 = scalar_select %p358, %s20, 0
      %s360 = sadd.s32 %s359, %s357
      %s361 = smul.addr %s360, 2
      %s362 = scalar_lea.vmem %s3, %s361
      // Predicated region
      $region29: #{bottleneck_forward.4} parent=27 // pred_check
        %p363 = pneg %p96
      $region30: #{bottleneck_forward.4} parent=27 // pred_check_branch
        %365 = sbr.rel (%p363) target = $region32
      $region31: #{bottleneck_forward.4} parent=27 // pred_region
        %s366 = smul.u32 2, %s20
      $region32: #{bottleneck_forward.4} parent=27 // pred_fallthru
        _
      // Predicated region
      $region33: #{bottleneck_forward.4} parent=27 // pred_check
        %p367 = pneg %p124
      $region34: #{bottleneck_forward.4} parent=27 // pred_check_branch
        %369 = sbr.rel (%p367) target = $region36
      $region35: #{bottleneck_forward.4} parent=27 // pred_region
        _
      $region36: #{bottleneck_forward.4} parent=27 // pred_fallthru
        _
    $region28: #{bottleneck_forward.4} parent=5 // pred_fallthru
      _
    %p370 = scmp.le.s32.totalorder 2, %s10
    // Predicated region
    $region37: #{bottleneck_forward.4} parent=5 // pred_check
      %p371 = pneg %p370
    $region38: #{bottleneck_forward.4} parent=5 // pred_check_branch
      %373 = sbr.rel (%p371) target = $region40
    $region39: #{bottleneck_forward.4} parent=5 // pred_region
      %s374 = ssub.s32 %s10, 2
      // Predicated region
      $region41: #{bottleneck_forward.4} parent=39 // pred_check
        %p375 = pneg %p102
      $region42: #{bottleneck_forward.4} parent=39 // pred_check_branch
        %377 = sbr.rel (%p375) target = $region44
      $region43: #{bottleneck_forward.4} parent=39 // pred_region
        %s378 = smul.u32 2, %s22
        %p379 = scmp.lt.s32.totalorder %s21, 1
        %s380 = scalar_select %p379, %s21, 1
        %p381 = scmp.lt.s32.totalorder %s378, 1
        %s382 = scalar_select %p381, %s378, 1
        %s383 = smul.addr %s380, 2
        %s384 = sadd.s32 %s382, %s383
        %s385 = smul.addr %s384, 2
        %s386 = scalar_lea.vmem %s2, %s385
      $region44: #{bottleneck_forward.4} parent=39 // pred_fallthru
        _
      // Predicated region
      $region45: #{bottleneck_forward.4} parent=39 // pred_check
        %p387 = pneg %p130
      $region46: #{bottleneck_forward.4} parent=39 // pred_check_branch
        %389 = sbr.rel (%p387) target = $region48
      $region47: #{bottleneck_forward.4} parent=39 // pred_region
        %p390 = scmp.lt.s32.totalorder %s21, 1
        %s391 = scalar_select %p390, %s21, 1
        %p392 = scmp.lt.s32.totalorder %s22, 0
        %s393 = scalar_select %p392, %s22, 0
        %s394 = sadd.s32 %s393, %s391
        %s395 = smul.addr %s394, 2
        %s396 = scalar_lea.vmem %s3, %s395
      $region48: #{bottleneck_forward.4} parent=39 // pred_fallthru
        _
    $region40: #{bottleneck_forward.4} parent=5 // pred_fallthru
      _
  $region6: #{bottleneck_forward.4} parent=0 // loop_footer
    %s14 = sadd.s32 1, %s10
  $region7: #{bottleneck_forward.4} parent=0 // loop_footer_branch
    %9 = sbr.rel target = $region3
  $region8: #{bottleneck_forward.4} parent=0 // loop_exit
    _

// kernel: bottleneck_forward.5
$region0: #{bottleneck_forward.5}
  #allocation0 [shape = 'u32[]', space=smem, size = 0x4, offset = 0x4, fixed_abs, tag = 'smem constant byte address 0x4 - core index']
  #allocation1 [shape = 'u32[144,128]{1,0:T(1,128)}', space=vmem, size = 0x12000, scoped, tag = 'internal scratch']
  #allocation2 [shape = 'bf16[8,290]{1,0:T(8,128)(2,1)}', space=vmem, size = 0x1800, scoped, tag = 'scratch operand']
  #allocation3 [shape = 'bf16[72,256]{1,0:T(8,128)(2,1)}', space=vmem, size = 0x9000, scoped, tag = 'scratch operand']
  %s0 = inlined_call_operand.vmem [shape: bf16[2,4,256], index: 0, kind: input, shape index: {}]
  %s1 = inlined_call_operand.vmem [shape: f32[4,2], index: 1, kind: input, shape index: {}]
  %s2 = inlined_call_operand.vmem [shape: bf16[4,72], index: 2, kind: input, shape index: {}]
  %s3 = inlined_call_operand.vmem [shape: bf16[2,4,256], index: 3, kind: output, shape index: {0}]
  %s4 = inlined_call_operand.vmem [shape: f32[2,2,4], index: 4, kind: output, shape index: {1}]
  %5 = xla_tuple %s3, %s4
  %s6 = sld [smem:[#allocation0]]
  $region53: #{bottleneck_forward.5} parent=0
    _
  %s8 = ssub.s32 1, %s6
  %s9 = scalar_select 0, %s8, %s6
  loop: start=0, step=1, limit=4
  $region2: #{bottleneck_forward.5} parent=0 // loop_pre_header
    _
  $region3: #{bottleneck_forward.5} parent=0 // loop_header
    %s11 = sphi 0, %s15
    %p12 = scmp.ge.s32.totalorder %s11, 4
    %s21 = sphi 0, %s23
    %s24 = sphi 0, %s21
    %s25 = sphi 0, %s24
    %s41 = sphi 0, %s25
    %s45 = sphi 0, %s45
    %s47 = sphi 0, %s45
    %s48 = sphi 0, %s47
    %s62 = sphi 0, %s48
    %s66 = sphi 0, %s66
    %s68 = sphi 0, %s66
    %s69 = sphi 0, %s68
    %s83 = sphi 0, %s69
    %s89 = sphi 0, %s91
    %s92 = sphi 0, %s89
    %s93 = sphi 0, %s92
    %s109 = sphi 0, %s93
    %s115 = sphi 0, %s117
    %s118 = sphi 0, %s115
    %s119 = sphi 0, %s118
    %s135 = sphi 0, %s119
  $region4: #{bottleneck_forward.5} parent=0 // loop_header_branch
    %14 = sbr.rel (%p12) target = $region8
  $region5: #{bottleneck_forward.5} parent=0 // loop_body
    %s16 = ssub.s32 %s11, 1
    %s17 = ssub.s32 %s11, 2
    %s18 = sadd.s32 %s11, 1
    %s19 = ssub.s32 %s11, %s18
    %p20 = scmp.eq.s32.totalorder %s19, 0
    %s22 = sadd.s32 %s21, 1
    %s23 = scalar_select %p20, %s21, %s22
    %p26 = pneg %p20
    %p27 = scmp.eq.s32.totalorder %s11, 1
    %p28 = por %p26, %p27
    %p29 = scmp.ne.s32.totalorder %s21, %s24
    %p30 = scmp.eq.s32.totalorder %s11, 0
    %p31 = por %p29, %p30
    %p32 = scmp.ne.s32.totalorder %s21, %s24
    %p33 = scmp.eq.s32.totalorder %s16, 1
    %p34 = por %p32, %p33
    %p35 = scmp.ne.s32.totalorder %s24, %s25
    %p36 = scmp.eq.s32.totalorder %s16, 0
    %p37 = por %p35, %p36
    %p38 = scmp.ne.s32.totalorder %s24, %s25
    %p39 = scmp.eq.s32.totalorder %s17, 1
    %p40 = por %p38, %p39
    %p42 = scmp.ne.s32.totalorder %s25, %s41
    %p43 = scmp.eq.s32.totalorder %s17, 0
    %p44 = por %p42, %p43
    %s46 = sadd.s32 %s45, 1
    %p49 = scmp.eq.s32.totalorder %s11, 1
    %p50 = scmp.ne.s32.totalorder %s45, %s47
    %p51 = scmp.eq.s32.totalorder %s11, 0
    %p52 = por %p50, %p51
    %p53 = scmp.ne.s32.totalorder %s45, %s47
    %p54 = scmp.eq.s32.totalorder %s16, 1
    %p55 = por %p53, %p54
    %p56 = scmp.ne.s32.totalorder %s47, %s48
    %p57 = scmp.eq.s32.totalorder %s16, 0
    %p58 = por %p56, %p57
    %p59 = scmp.ne.s32.totalorder %s47, %s48
    %p60 = scmp.eq.s32.totalorder %s17, 1
    %p61 = por %p59, %p60
    %p63 = scmp.ne.s32.totalorder %s48, %s62
    %p64 = scmp.eq.s32.totalorder %s17, 0
    %p65 = por %p63, %p64
    %s67 = sadd.s32 %s66, 1
    %p70 = scmp.eq.s32.totalorder %s11, 1
    %p71 = scmp.ne.s32.totalorder %s66, %s68
    %p72 = scmp.eq.s32.totalorder %s11, 0
    %p73 = por %p71, %p72
    %p74 = scmp.ne.s32.totalorder %s66, %s68
    %p75 = scmp.eq.s32.totalorder %s16, 1
    %p76 = por %p74, %p75
    %p77 = scmp.ne.s32.totalorder %s68, %s69
    %p78 = scmp.eq.s32.totalorder %s16, 0
    %p79 = por %p77, %p78
    %p80 = scmp.ne.s32.totalorder %s68, %s69
    %p81 = scmp.eq.s32.totalorder %s17, 1
    %p82 = por %p80, %p81
    %p84 = scmp.ne.s32.totalorder %s69, %s83
    %p85 = scmp.eq.s32.totalorder %s17, 0
    %p86 = por %p84, %p85
    %s87 = ssub.s32 %s11, %s18
    %p88 = scmp.eq.s32.totalorder %s87, 0
    %s90 = sadd.s32 %s89, 1
    %s91 = scalar_select %p88, %s89, %s90
    %p94 = pneg %p88
    %p95 = scmp.eq.s32.totalorder %s11, 1
    %p96 = por %p94, %p95
    %p97 = scmp.ne.s32.totalorder %s89, %s92
    %p98 = scmp.eq.s32.totalorder %s11, 0
    %p99 = por %p97, %p98
    %p100 = scmp.ne.s32.totalorder %s89, %s92
    %p101 = scmp.eq.s32.totalorder %s16, 1
    %p102 = por %p100, %p101
    %p103 = scmp.ne.s32.totalorder %s92, %s93
    %p104 = scmp.eq.s32.totalorder %s16, 0
    %p105 = por %p103, %p104
    %p106 = scmp.ne.s32.totalorder %s92, %s93
    %p107 = scmp.eq.s32.totalorder %s17, 1
    %p108 = por %p106, %p107
    %p110 = scmp.ne.s32.totalorder %s93, %s109
    %p111 = scmp.eq.s32.totalorder %s17, 0
    %p112 = por %p110, %p111
    %s113 = ssub.s32 %s11, %s18
    %p114 = scmp.eq.s32.totalorder %s113, 0
    %s116 = sadd.s32 %s115, 1
    %s117 = scalar_select %p114, %s115, %s116
    %p120 = pneg %p114
    %p121 = scmp.eq.s32.totalorder %s11, 1
    %p122 = por %p120, %p121
    %p123 = scmp.ne.s32.totalorder %s115, %s118
    %p124 = scmp.eq.s32.totalorder %s11, 0
    %p125 = por %p123, %p124
    %p126 = scmp.ne.s32.totalorder %s115, %s118
    %p127 = scmp.eq.s32.totalorder %s16, 1
    %p128 = por %p126, %p127
    %p129 = scmp.ne.s32.totalorder %s118, %s119
    %p130 = scmp.eq.s32.totalorder %s16, 0
    %p131 = por %p129, %p130
    %p132 = scmp.ne.s32.totalorder %s118, %s119
    %p133 = scmp.eq.s32.totalorder %s17, 1
    %p134 = por %p132, %p133
    %p136 = scmp.ne.s32.totalorder %s119, %s135
    %p137 = scmp.eq.s32.totalorder %s17, 0
    %p138 = por %p136, %p137
    %p139 = scmp.le.s32.totalorder 1, %s11
    %p140 = scmp.lt.s32.totalorder %s11, 3
    %p141 = pnand %p139, %p140
    %p142 = pneg %p141
    // Predicated region
    $region9: #{bottleneck_forward.5} parent=5 // pred_check
      _
    $region10: #{bottleneck_forward.5} parent=5 // pred_check_branch
      %144 = sbr.rel (%p141) target = $region12
    $region11: #{bottleneck_forward.5} parent=5 // pred_region
      %s145 = ssub.s32 %s11, 1
      // Predicated region
      $region13: #{bottleneck_forward.5} parent=11 // pred_check
        %p146 = pneg %p58
      $region14: #{bottleneck_forward.5} parent=11 // pred_check_branch
        %148 = sbr.rel (%p146) target = $region16
      $region15: #{bottleneck_forward.5} parent=11 // pred_region
        _
      $region16: #{bottleneck_forward.5} parent=11 // pred_fallthru
        _
      // Predicated region
      $region17: #{bottleneck_forward.5} parent=11 // pred_check
        %p149 = pneg %p79
      $region18: #{bottleneck_forward.5} parent=11 // pred_check_branch
        %151 = sbr.rel (%p149) target = $region20
      $region19: #{bottleneck_forward.5} parent=11 // pred_region
        _
      $region20: #{bottleneck_forward.5} parent=11 // pred_fallthru
        _
    $region12: #{bottleneck_forward.5} parent=5 // pred_fallthru
      _
    %p152 = scmp.lt.s32.totalorder %s11, 2
    // Predicated region
    $region21: #{bottleneck_forward.5} parent=5 // pred_check
      %p153 = pneg %p152
    $region22: #{bottleneck_forward.5} parent=5 // pred_check_branch
      %155 = sbr.rel (%p153) target = $region24
    $region23: #{bottleneck_forward.5} parent=5 // pred_region
      // Predicated region
      $region25: #{bottleneck_forward.5} parent=23 // pred_check
        %p156 = pneg %p31
      $region26: #{bottleneck_forward.5} parent=23 // pred_check_branch
        %158 = sbr.rel (%p156) target = $region28
      $region27: #{bottleneck_forward.5} parent=23 // pred_region
        %p159 = scmp.lt.s32.totalorder %s11, 1
        %s160 = scalar_select %p159, %s11, 1
        %s161 = smul.addr %s160, 2
        %s162 = smul.addr %s161, 2
        %s163 = scalar_lea.vmem %s0, %s162
      $region28: #{bottleneck_forward.5} parent=23 // pred_fallthru
        _
    $region24: #{bottleneck_forward.5} parent=5 // pred_fallthru
      _
    %p164 = scmp.le.s32.totalorder 1, %s11
    %p165 = scmp.lt.s32.totalorder %s11, 3
    %p166 = pnand %p164, %p165
    %p167 = pneg %p166
    // Predicated region
    $region29: #{bottleneck_forward.5} parent=5 // pred_check
      _
    $region30: #{bottleneck_forward.5} parent=5 // pred_check_branch
      %169 = sbr.rel (%p166) target = $region32
    $region31: #{bottleneck_forward.5} parent=5 // pred_region
      %s170 = ssub.s32 %s11, 1
      %p171 = scmp.lt.s32.totalorder %s16, 1
      %s172 = scalar_select %p171, %s16, 1
      %s173 = smul.addr %s172, 2
      %s174 = smul.addr %s173, 2
      %s175 = scalar_lea.vmem %s0, %s174
      %p176 = pneg %p37
      %p177 = pneg %p34
      %p178 = pneg %p58
      %p179 = pneg %p55
      %p180 = pneg %p79
      %p181 = pneg %p76
      %p182 = pneg %p105
      %p183 = pneg %p102
      %p184 = scmp.lt.s32.totalorder %s16, 1
      %s185 = scalar_select %p184, %s16, 1
      %s186 = smul.addr %s185, 2
      %s187 = smul.addr %s186, 2
      %s188 = scalar_lea.vmem %s3, %s187
      %p189 = pneg %p131
      %p190 = pneg %p128
      %p191 = scmp.lt.s32.totalorder %s16, 1
      %s192 = scalar_select %p191, %s16, 1
      %s193 = smul.addr %s192, 2
      %s194 = scalar_lea.vmem %s4, %s193
      %p195 = scmp.lt.s32.totalorder %s16, 1
      %s196 = scalar_select %p195, %s16, 1
      %s197 = smul.addr %s196, 2
      %s198 = smul.addr %s197, 2
      %s199 = scalar_lea.vmem %s0, %s198
      %p200 = scmp.lt.s32.totalorder %s16, 1
      %s201 = scalar_select %p200, %s16, 1
      %s202 = smul.addr %s201, 2
      %s203 = smul.addr %s202, 2
      %s204 = scalar_lea.vmem %s3, %s203
      %p205 = scmp.lt.s32.totalorder %s16, 1
      %s206 = scalar_select %p205, %s16, 1
      %s207 = smul.addr %s206, 2
      %s208 = scalar_lea.vmem %s4, %s207
      %v212 = vld [vmem:[%s199] sm:$0xf]
      %v213 = vunpack.c.l.bf16 %v212
      %v214 = vld [vmem:[%s1] sm:$0xf]
      %216 = vset.pattern.permute.xlu0 0
      %217 = vperm.xlu0 %216, %v214
      %v218 = vpop.permute.xlu0 %217
      %v220 = vunpack.c.l.s4 839922192
      %v221 = vunpack.c.0.s8 %v220
      %v222 = vlaneseq
      %v223 = vshrl.u32 %v222, 7
      %v224 = vsub.s32 %v221, %v223
      %v225 = vrot.slane %v218, %v224
      %v227 = vmul.f32 %v213, %v225
      %228 = vset.pattern.permute.xlu0 1
      %229 = vperm.xlu0 %228, %v214
      %v230 = vpop.permute.xlu0 %229
      %v232 = vunpack.c.l.s4 839922192
      %v233 = vunpack.c.0.s8 %v232
      %v234 = vlaneseq
      %v235 = vshrl.u32 %v234, 7
      %v236 = vsub.s32 %v233, %v235
      %v237 = vrot.slane %v230, %v236
      %v239 = vadd.f32 %v227, %v237
      %v240 = vmax.f32 %v239, 0.0
      %v242 = vcombine.high %v240, %v240
      %v244 = vpack.c.bf16 %v240, %v240
      %v245 = vpack.c.bf16 %v242, %v242
      %vm246 = vcmask 1041408
      %v249 = vsel %vm246, %v244, 0
      %v251 = vsel %vm246, %v245, 0
      %vm252 = vcmask 134144
      %253 = vst.msk [vmem:[#allocation2] sm:$0xf] %vm252, 0
      %vm254 = vcmask 273544
      %255 = vst.msk [vmem:[#allocation2 + $0x8] sm:$0xf] %vm254, 0
      %v258 = vunpack.c.l.b16 %v249
      %v259 = vunpack.c.l.b16 %v251
      %v260 = vpack.c.b16 %v259, %v258
      %261 = vrot.lane.b32.xlu0 %v260, 17
      %v262 = vpop.permute.xlu0 %261
      %v263 = vrot.slane %v262, 4
      %vm264 = vcmask 138240
      %v265 = vsel %vm264, %v263, %v262
      %vm268 = vcmask 1043592
      %vm269 = vcmask 1047556
      %vm270 = vmor %vm269, %vm268
      %271 = vst.msk [vmem:[#allocation2] sm:$0xff] %vm270, %v265
      %272 = vst.msk [vmem:[#allocation2 + $0x8] sm:$0xf] %vm252, %v263
      %v273 = vlaneseq
      %v274 = vand.u32 %v273, 127
      %v275 = vadd.s32 %v274, 128
      %vm276 = vcmp.lt.s32.totalorder %v274, 0
      %v277 = vsub.s32 0, %v274
      %v278 = vsel %vm276, %v277, %v274
      %v279 = vshrl.u32 %v278, 4
      %v280 = vand.u32 %v278, 15
      %v281 = vsub.s32 0, %v280
      %v282 = vsel %vm276, %v281, %v280
      %vm283 = vcmp.lt.s32.totalorder %v275, 0
      %v284 = vsub.s32 0, %v275
      %v285 = vsel %vm283, %v284, %v275
      %v286 = vshrl.u32 %v285, 4
      %v287 = vand.u32 %v285, 15
      %v288 = vsub.s32 0, %v287
      %v289 = vsel %vm283, %v288, %v287
      %vm290 = vcmp.ne.s32.totalorder %v282, 0
      %vm291 = vcmp.ne.s32.totalorder %v289, 0
      %vm292 = vcmp.lt.s32.totalorder %v282, 0
      %vm293 = vcmp.lt.s32.totalorder %v289, 0
      %vm294 = vmand %vm292, %vm290
      %vm295 = vmand %vm293, %vm291
      %v296 = vadd.s32 %v282, 16
      %v297 = vadd.s32 %v289, 16
      %v298 = vsel %vm294, %v296, %v282
      %v299 = vsel %vm295, %v297, %v289
      %vm300 = vcmp.ne.s32.totalorder %v298, 0
      %vm301 = vcmp.ne.s32.totalorder %v299, 0
      %vm302 = vcmp.ne.s32.totalorder %v298, 15
      %vm303 = vcmp.ne.s32.totalorder %v299, 15
      %v304 = vld [vmem:[#allocation2] sm:$0xff]
      %vm305 = vmpackc.low %vm301, %vm300
      %v306 = vsel %vm305, %v304, 0
      %307 = vst [vmem:[#allocation3] sm:$0xff] %v306
      %v308 = vld [vmem:[#allocation2] sm:$0xff]
      %v309 = vld [vmem:[#allocation2 + $0x8] sm:$0xf]
      %312 = vrot.lane.b32.xlu0 %v308, 127
      %v313 = vpop.permute.xlu0 %312
      %314 = vrot.lane.b32.xlu0 %v309, 127
      %v315 = vpop.permute.xlu0 %314
      %v316 = vrot.slane %v313, 4
      %v317 = vrot.slane %v315, 4
      %vm318 = vcmask 1043456
      %v319 = vsel %vm318, %v316, %v317
      %vm320 = vcmask 1039360
      %v321 = vsel %vm320, %v313, %v319
      %323 = vst [vmem:[#allocation3 + $0x8] sm:$0xff] %v321
      %v324 = vld [vmem:[#allocation2] sm:$0xff]
      %v325 = vld [vmem:[#allocation2 + $0x8] sm:$0xf]
      %vm326 = vmpackc.low %vm303, %vm302
      %v327 = vsel %vm326, 65537, 0
      %328 = vrot.lane.b32.xlu0 %v327, 2
      %v329 = vpop.permute.xlu0 %328
      %v330 = vrot.slane %v329, 4
      %vm331 = vcmask 15360
      %v332 = vsel %vm331, %v330, %v329
      %vm333 = vcmp.ne.s16.totalorder %v332, 0
      %vm334 = vcmp.ne.s16.totalorder %v330, 0
      %v335 = vsel %vm333, %v324, 0
      %v336 = vsel %vm334, %v325, 0
      %339 = vrot.lane.b32.xlu0 %v335, 126
      %v340 = vpop.permute.xlu0 %339
      %341 = vrot.lane.b32.xlu0 %v336, 126
      %v342 = vpop.permute.xlu0 %341
      %v343 = vrot.slane %v340, 4
      %v344 = vrot.slane %v342, 4
      %v345 = vsel %vm318, %v343, %v344
      %vm346 = vcmask 1031168
      %v347 = vsel %vm346, %v340, %v345
      %349 = vst [vmem:[#allocation3 + $0x10] sm:$0xff] %v347
      %v350 = vld [vmem:[#allocation2] sm:$0xff]
      %v351 = vld [vmem:[#allocation2 + $0x8] sm:$0xf]
      %v352 = vsel %vm305, 65537, 0
      %353 = vrot.lane.b32.xlu0 %v352, 16
      %v354 = vpop.permute.xlu0 %353
      %v355 = vrot.slane %v354, 4
      %vm356 = vcmask 130048
      %v357 = vsel %vm356, %v355, %v354
      %vm358 = vcmp.ne.s16.totalorder %v357, 0
      %vm359 = vcmp.ne.s16.totalorder %v355, 0
      %v360 = vsel %vm358, %v350, 0
      %v361 = vsel %vm359, %v351, 0
      %364 = vrot.lane.b32.xlu0 %v360, 112
      %v365 = vpop.permute.xlu0 %364
      %366 = vrot.lane.b32.xlu0 %v361, 112
      %v367 = vpop.permute.xlu0 %366
      %v368 = vrot.slane %v365, 4
      %v369 = vrot.slane %v367, 4
      %v370 = vsel %vm318, %v368, %v369
      %vm371 = vcmask 916480
      %v372 = vsel %vm371, %v365, %v370
      %374 = vst [vmem:[#allocation3 + $0x18] sm:$0xff] %v372
      %v375 = vld [vmem:[#allocation2] sm:$0xff]
      %v376 = vld [vmem:[#allocation2 + $0x8] sm:$0xf]
      %379 = vrot.lane.b32.xlu0 %v375, 111
      %v380 = vpop.permute.xlu0 %379
      %381 = vrot.lane.b32.xlu0 %v376, 111
      %v382 = vpop.permute.xlu0 %381
      %v383 = vrot.slane %v380, 4
      %v384 = vrot.slane %v382, 4
      %v385 = vsel %vm318, %v383, %v384
      %vm386 = vcmask 908288
      %v387 = vsel %vm386, %v380, %v385
      %389 = vst [vmem:[#allocation3 + $0x20] sm:$0xff] %v387
      %v390 = vld [vmem:[#allocation2] sm:$0xff]
      %v391 = vld [vmem:[#allocation2 + $0x8] sm:$0xf]
      %392 = vrot.lane.b32.xlu0 %v327, 18
      %v393 = vpop.permute.xlu0 %392
      %v394 = vrot.slane %v393, 4
      %vm395 = vcmask 146432
      %v396 = vsel %vm395, %v394, %v393
      %vm397 = vcmp.ne.s16.totalorder %v396, 0
      %vm398 = vcmp.ne.s16.totalorder %v394, 0
      %v399 = vsel %vm397, %v390, 0
      %v400 = vsel %vm398, %v391, 0
      %403 = vrot.lane.b32.xlu0 %v399, 110
      %v404 = vpop.permute.xlu0 %403
      %405 = vrot.lane.b32.xlu0 %v400, 110
      %v406 = vpop.permute.xlu0 %405
      %v407 = vrot.slane %v404, 4
      %v408 = vrot.slane %v406, 4
      %v409 = vsel %vm318, %v407, %v408
      %vm410 = vcmask 900096
      %v411 = vsel %vm410, %v404, %v409
      %413 = vst [vmem:[#allocation3 + $0x28] sm:$0xff] %v411
      %v414 = vld [vmem:[#allocation2] sm:$0xff]
      %v415 = vld [vmem:[#allocation2 + $0x8] sm:$0xf]
      %416 = vrot.lane.b32.xlu0 %v352, 32
      %v417 = vpop.permute.xlu0 %416
      %v418 = vrot.slane %v417, 4
      %vm419 = vcmask 261120
      %v420 = vsel %vm419, %v418, %v417
      %vm421 = vcmp.ne.s16.totalorder %v420, 0
      %vm422 = vcmp.ne.s16.totalorder %v418, 0
      %v423 = vsel %vm421, %v414, 0
      %v424 = vsel %vm422, %v415, 0
      %427 = vrot.lane.b32.xlu0 %v423, 96
      %v428 = vpop.permute.xlu0 %427
      %429 = vrot.lane.b32.xlu0 %v424, 96
      %v430 = vpop.permute.xlu0 %429
      %v431 = vrot.slane %v428, 4
      %v432 = vrot.slane %v430, 4
      %v433 = vsel %vm318, %v431, %v432
      %vm434 = vcmask 785408
      %v435 = vsel %vm434, %v428, %v433
      %437 = vst [vmem:[#allocation3 + $0x30] sm:$0xff] %v435
      %v438 = vld [vmem:[#allocation2] sm:$0xff]
      %v439 = vld [vmem:[#allocation2 + $0x8] sm:$0xf]
      %442 = vrot.lane.b32.xlu0 %v438, 95
      %v443 = vpop.permute.xlu0 %442
      %444 = vrot.lane.b32.xlu0 %v439, 95
      %v445 = vpop.permute.xlu0 %444
      %v446 = vrot.slane %v443, 4
      %v447 = vrot.slane %v445, 4
      %v448 = vsel %vm318, %v446, %v447
      %vm449 = vcmask 777216
      %v450 = vsel %vm449, %v443, %v448
      %452 = vst [vmem:[#allocation3 + $0x38] sm:$0xff] %v450
      %v453 = vld [vmem:[#allocation2] sm:$0xff]
      %v454 = vld [vmem:[#allocation2 + $0x8] sm:$0xf]
      %455 = vrot.lane.b32.xlu0 %v327, 34
      %v456 = vpop.permute.xlu0 %455
      %v457 = vrot.slane %v456, 4
      %vm458 = vcmask 277504
      %v459 = vsel %vm458, %v457, %v456
      %vm460 = vcmp.ne.s16.totalorder %v459, 0
      %vm461 = vcmp.ne.s16.totalorder %v457, 0
      %v462 = vsel %vm460, %v453, 0
      %v463 = vsel %vm461, %v454, 0
      %466 = vrot.lane.b32.xlu0 %v462, 94
      %v467 = vpop.permute.xlu0 %466
      %468 = vrot.lane.b32.xlu0 %v463, 94
      %v469 = vpop.permute.xlu0 %468
      %v470 = vrot.slane %v467, 4
      %v471 = vrot.slane %v469, 4
      %v472 = vsel %vm318, %v470, %v471
      %vm473 = vcmask 769024
      %v474 = vsel %vm473, %v467, %v472
      %476 = vst [vmem:[#allocation3 + $0x40] sm:$0xff] %v474
      %v477 = vld [vmem:[%s2] sm:$0x3]
      %v478 = vld [vmem:[#allocation3] sm:$0xff]
      %v479 = vld [vmem:[#allocation3 + $0x8] sm:$0xff]
      %v480 = vld [vmem:[#allocation3 + $0x10] sm:$0xff]
      %v481 = vld [vmem:[#allocation3 + $0x18] sm:$0xff]
      %v482 = vld [vmem:[#allocation3 + $0x20] sm:$0xff]
      %v483 = vld [vmem:[#allocation3 + $0x28] sm:$0xff]
      %v484 = vld [vmem:[#allocation3 + $0x30] sm:$0xff]
      %v485 = vld [vmem:[#allocation3 + $0x38] sm:$0xff]
      %v486 = vld [vmem:[#allocation3 + $0x40] sm:$0xff]
      %v496 = vunpack.c.l.b16 %v478
      %v497 = vunpack.c.h.b16 %v478
      %v498 = vunpack.c.l.b16 %v479
      %v499 = vunpack.c.h.b16 %v479
      %v500 = vunpack.c.l.b16 %v480
      %v501 = vunpack.c.h.b16 %v480
      %v502 = vunpack.c.l.b16 %v481
      %v503 = vunpack.c.h.b16 %v481
      %v504 = vunpack.c.l.b16 %v482
      %v505 = vunpack.c.h.b16 %v482
      %v506 = vunpack.c.l.b16 %v483
      %v507 = vunpack.c.h.b16 %v483
      %v508 = vunpack.c.l.b16 %v484
      %v509 = vunpack.c.h.b16 %v484
      %v510 = vunpack.c.l.b16 %v485
      %v511 = vunpack.c.h.b16 %v485
      %v512 = vunpack.c.l.b16 %v486
      %v513 = vunpack.c.h.b16 %v486
      %v514 = vpack.c.b16 %v498, %v496
      %v515 = vpack.c.b16 %v499, %v497
      %v516 = vpack.c.b16 %v502, %v500
      %v517 = vpack.c.b16 %v503, %v501
      %v518 = vpack.c.b16 %v506, %v504
      %v519 = vpack.c.b16 %v507, %v505
      %v520 = vpack.c.b16 %v510, %v508
      %v521 = vpack.c.b16 %v511, %v509
      %v522 = vpack.c.b16 %v512, %v512
      %v523 = vpack.c.b16 %v513, %v513
      %vm532 = vcmask 588800
      %v534 = vsel %vm532, %v477, 0
      %vm536 = vcmask 1043456
      %v538 = vsel %vm536, %v522, 0
      %v541 = vsel %vm536, %v523, 0
      %543 = vmatprep.subr.bf16.mxu0 %v515
      %544 = vmatpush1.bf16.msra.mxu0 %v514
      %545 = vmatprep.subr.bf16.mxu0 %v517
      %546 = vmatpush1.bf16.msra.mxu0 %v516
      %547 = vmatprep.subr.bf16.mxu0 %v519
      %548 = vmatpush1.bf16.msra.mxu0 %v518
      %549 = vmatprep.subr.bf16.mxu0 %v521
      %550 = vmatpush1.bf16.msra.mxu0 %v520
      %551 = vmatprep.subr.bf16.mxu0 %v541
      %552 = vmatpush1.bf16.msra.mxu0 %v538
      %553 = vmatprep.subr.bf16.mxu0 0
      %554 = vmatpush1.bf16.msra.mxu0 0
      %555 = vmatprep.subr.bf16.mxu0 0
      %556 = vmatpush1.bf16.msra.mxu0 0
      %557 = vmatprep.subr.bf16.mxu0 0
      %558 = vmatpush1.bf16.msra.mxu0 0
      %559 = vmatprep.subr.bf16.mxu0 0
      %560 = vmatpush1.bf16.msra.mxu0 0
      %561 = vmatprep.subr.bf16.mxu0 0
      %562 = vmatpush1.bf16.msra.mxu0 0
      %563 = vmatprep.subr.bf16.mxu0 0
      %564 = vmatpush1.bf16.msra.mxu0 0
      %565 = vmatprep.subr.bf16.mxu0 0
      %566 = vmatpush1.bf16.msra.mxu0 0
      %567 = vmatprep.subr.bf16.mxu0 0
      %568 = vmatpush1.bf16.msra.mxu0 0
      %569 = vmatprep.subr.bf16.mxu0 0
      %570 = vmatpush1.bf16.msra.mxu0 0
      %571 = vmatprep.subr.bf16.mxu0 0
      %572 = vmatpush1.bf16.msra.mxu0 0
      %573 = vmatprep.subr.bf16.mxu0 0
      %574 = vmatpush1.bf16.msra.mxu0 0
      %575 = vmatprep.mubr.bf16.mxu0 0
      %576 = vmatmul.mubr.bf16.gmra.mrb[0].mxu0 %v534
      %v577 = vpop.f32.mrb[0].mxu0
      %v578 = vadd.f32 0.0, %v577
      %v579 = vpop.f32.mrb[0].mxu0
      %v580 = vadd.f32 0.0, %v579
      %v581 = vpop.f32.mrb[0].mxu0
      %v582 = vpop.f32.mrb[0].mxu0
      %583 = vdwg.mxu0
      %v584 = vpack.c.bf16 %v578, %v578
      %v585 = vpack.c.bf16 %v580, %v580
      %v588 = vcombine.low %v584, %v585
      %v590 = vunpack.c.l.s4 1983009808
      %v591 = vunpack.c.0.s8 %v590
      %v592 = vlaneseq
      %v593 = vshrl.u32 %v592, 7
      %v594 = vsub.s32 %v591, %v593
      %v595 = vrot.slane %v588, %v594
      %597 = vst [vmem:[%s204] sm:$0xf] %v595
      %v598 = vsel %vm536, %v578, 0.0
      %v599 = vsel %vm536, %v580, 0.0
      %v600 = vadd.f32 %v598, %v599
      %601 = vadd.xlane.f32.xlu0 %v600
      %v602 = vpop.xlane.xlu0 %601
      %v603 = vmul.f32 %v578, %v578
      %v604 = vmul.f32 %v580, %v580
      %v605 = vsel %vm536, %v603, 0.0
      %v606 = vsel %vm536, %v604, 0.0
      %v607 = vadd.f32 %v605, %v606
      %608 = vadd.xlane.f32.xlu0 %v607
      %v609 = vpop.xlane.xlu0 %608
      %vm610 = vcmask 7168
      %v611 = vsel %vm610, %v602, %v609
      %612 = vxpose.xlu0.b32.start [1/16] %v611, 128
      %613 = vxpose.xlu0.b32.cont [2/16] 0.0, 128
      %614 = vxpose.xlu0.b32.cont [3/16] 0.0, 128
      %615 = vxpose.xlu0.b32.cont [4/16] 0.0, 128
      %616 = vxpose.xlu0.b32.cont [5/16] 0.0, 128
      %617 = vxpose.xlu0.b32.cont [6/16] 0.0, 128
      %618 = vxpose.xlu0.b32.cont [7/16] 0.0, 128
      %619 = vxpose.xlu0.b32.cont [8/16] 0.0, 128
      %620 = vxpose.xlu0.b32.cont [9/16] 0.0, 128
      %621 = vxpose.xlu0.b32.cont [10/16] 0.0, 128
      %622 = vxpose.xlu0.b32.cont [11/16] 0.0, 128
      %623 = vxpose.xlu0.b32.cont [12/16] 0.0, 128
      %624 = vxpose.xlu0.b32.cont [13/16] 0.0, 128
      %625 = vxpose.xlu0.b32.cont [14/16] 0.0, 128
      %626 = vxpose.xlu0.b32.cont [15/16] 0.0, 128
      %627 = vxpose.xlu0.b32.end [16/16] 0.0, 128
      %v628 = vpop.trf.xlu0
      %v629 = vpop.trf.xlu0
      %v630 = vpop.trf.xlu0
      %v631 = vpop.trf.xlu0
      %v632 = vpop.trf.xlu0
      %v633 = vpop.trf.xlu0
      %v634 = vpop.trf.xlu0
      %v635 = vpop.trf.xlu0
      %v636 = vpop.trf.xlu0
      %v637 = vpop.trf.xlu0
      %v638 = vpop.trf.xlu0
      %v639 = vpop.trf.xlu0
      %v640 = vpop.trf.xlu0
      %v641 = vpop.trf.xlu0
      %v642 = vpop.trf.xlu0
      %v643 = vpop.trf.xlu0
      %vm644 = vcmask 25600
      %645 = vst.msk [vmem:[%s208] sm:$0x3] %vm644, %v628
      %p646 = scmp.lt.s32.totalorder %s16, 1
      %s647 = scalar_select %p646, %s16, 1
      %s648 = smul.addr %s647, 2
      %s649 = smul.addr %s648, 2
      %s650 = scalar_lea.vmem %s3, %s649
      %p651 = scmp.lt.s32.totalorder %s16, 1
      %s652 = scalar_select %p651, %s16, 1
      %s653 = smul.addr %s652, 2
      %s654 = scalar_lea.vmem %s4, %s653
      // Predicated region
      $region33: #{bottleneck_forward.5} parent=31 // pred_check
        %p655 = pneg %p102
      $region34: #{bottleneck_forward.5} parent=31 // pred_check_branch
        %657 = sbr.rel (%p655) target = $region36
      $region35: #{bottleneck_forward.5} parent=31 // pred_region
        _
      $region36: #{bottleneck_forward.5} parent=31 // pred_fallthru
        _
      // Predicated region
      $region37: #{bottleneck_forward.5} parent=31 // pred_check
        %p658 = pneg %p128
      $region38: #{bottleneck_forward.5} parent=31 // pred_check_branch
        %660 = sbr.rel (%p658) target = $region40
      $region39: #{bottleneck_forward.5} parent=31 // pred_region
        _
      $region40: #{bottleneck_forward.5} parent=31 // pred_fallthru
        _
    $region32: #{bottleneck_forward.5} parent=5 // pred_fallthru
      _
    %p661 = scmp.le.s32.totalorder 2, %s11
    // Predicated region
    $region41: #{bottleneck_forward.5} parent=5 // pred_check
      %p662 = pneg %p661
    $region42: #{bottleneck_forward.5} parent=5 // pred_check_branch
      %664 = sbr.rel (%p662) target = $region44
    $region43: #{bottleneck_forward.5} parent=5 // pred_region
      %s665 = ssub.s32 %s11, 2
      // Predicated region
      $region45: #{bottleneck_forward.5} parent=43 // pred_check
        %p666 = pneg %p108
      $region46: #{bottleneck_forward.5} parent=43 // pred_check_branch
        %668 = sbr.rel (%p666) target = $region48
      $region47: #{bottleneck_forward.5} parent=43 // pred_region
        %p669 = scmp.lt.s32.totalorder %s17, 1
        %s670 = scalar_select %p669, %s17, 1
        %s671 = smul.addr %s670, 2
        %s672 = smul.addr %s671, 2
        %s673 = scalar_lea.vmem %s3, %s672
      $region48: #{bottleneck_forward.5} parent=43 // pred_fallthru
        _
      // Predicated region
      $region49: #{bottleneck_forward.5} parent=43 // pred_check
        %p674 = pneg %p134
      $region50: #{bottleneck_forward.5} parent=43 // pred_check_branch
        %676 = sbr.rel (%p674) target = $region52
      $region51: #{bottleneck_forward.5} parent=43 // pred_region
        %p677 = scmp.lt.s32.totalorder %s17, 1
        %s678 = scalar_select %p677, %s17, 1
        %s679 = smul.addr %s678, 2
        %s680 = scalar_lea.vmem %s4, %s679
      $region52: #{bottleneck_forward.5} parent=43 // pred_fallthru
        _
    $region44: #{bottleneck_forward.5} parent=5 // pred_fallthru
      _
  $region6: #{bottleneck_forward.5} parent=0 // loop_footer
    %s15 = sadd.s32 1, %s11
  $region7: #{bottleneck_forward.5} parent=0 // loop_footer_branch
    %10 = sbr.rel target = $region3
  $region8: #{bottleneck_forward.5} parent=0 // loop_exit
    _

// kernel: bottleneck_forward.7
$region0: #{bottleneck_forward.7}
  #allocation0 [shape = 'u32[]', space=smem, size = 0x4, offset = 0x4, fixed_abs, tag = 'smem constant byte address 0x4 - core index']
  #allocation1 [shape = 'u32[144,128]{1,0:T(1,128)}', space=vmem, size = 0x12000, scoped, tag = 'internal scratch']
  %s0 = inlined_call_operand.vmem [shape: bf16[2,16,256], index: 0, kind: input, shape index: {}]
  %s1 = inlined_call_operand.vmem [shape: f32[2,16,256], index: 1, kind: input, shape index: {}]
  %s2 = inlined_call_operand.vmem [shape: f32[16,2], index: 2, kind: input, shape index: {}]
  %s3 = inlined_call_operand.vmem [shape: f32[2,16,256], index: 3, kind: output, shape index: {}]
  %s4 = sld [smem:[#allocation0]]
  $region45: #{bottleneck_forward.7} parent=0
    _
  %s6 = ssub.s32 1, %s4
  %s7 = scalar_select 0, %s6, %s4
  loop: start=0, step=1, limit=4
  $region2: #{bottleneck_forward.7} parent=0 // loop_pre_header
    _
  $region3: #{bottleneck_forward.7} parent=0 // loop_header
    %s9 = sphi 0, %s13
    %p10 = scmp.ge.s32.totalorder %s9, 4
    %s16 = sphi 0, %s28
    %s17 = sphi 0, %s24
    %s18 = sphi 0, %s16
    %s19 = sphi 0, %s17
    %s20 = sphi 0, %s18
    %s21 = sphi 0, %s19
    %s33 = sphi 0, %s35
    %s36 = sphi 0, %s33
    %s37 = sphi 0, %s36
    %s53 = sphi 0, %s37
    %s61 = sphi 0, %s63
    %s64 = sphi 0, %s61
    %s65 = sphi 0, %s64
    %s81 = sphi 0, %s65
    %s85 = sphi 0, %s85
    %s87 = sphi 0, %s85
    %s88 = sphi 0, %s87
    %s102 = sphi 0, %s88
    %s110 = sphi 0, %s112
    %s113 = sphi 0, %s110
    %s114 = sphi 0, %s113
    %s130 = sphi 0, %s114
  $region4: #{bottleneck_forward.7} parent=0 // loop_header_branch
    %12 = sbr.rel (%p10) target = $region8
  $region5: #{bottleneck_forward.7} parent=0 // loop_body
    %s14 = ssub.s32 %s9, 1
    %s15 = ssub.s32 %s9, 2
    %s22 = sadd.s32 1, %s17
    %p23 = scmp.ge.s32.totalorder %s22, 1
    %s24 = scalar_select %p23, 0, %s22
    %s25 = sadd.s32 1, %s16
    %s26 = scalar_select %p23, %s25, %s16
    %p27 = scmp.ge.s32.totalorder %s26, 2
    %s28 = scalar_select %p27, 0, %s26
    %s29 = ssub.s32 %s16, %s28
    %s30 = ssub.s32 %s17, %s24
    %s31 = sor.u32 %s29, %s30
    %p32 = scmp.eq.s32.totalorder %s31, 0
    %s34 = sadd.s32 %s33, 1
    %s35 = scalar_select %p32, %s33, %s34
    %p38 = pneg %p32
    %p39 = scmp.eq.s32.totalorder %s9, 1
    %p40 = por %p38, %p39
    %p41 = scmp.ne.s32.totalorder %s33, %s36
    %p42 = scmp.eq.s32.totalorder %s9, 0
    %p43 = por %p41, %p42
    %p44 = scmp.ne.s32.totalorder %s33, %s36
    %p45 = scmp.eq.s32.totalorder %s14, 1
    %p46 = por %p44, %p45
    %p47 = scmp.ne.s32.totalorder %s36, %s37
    %p48 = scmp.eq.s32.totalorder %s14, 0
    %p49 = por %p47, %p48
    %p50 = scmp.ne.s32.totalorder %s36, %s37
    %p51 = scmp.eq.s32.totalorder %s15, 1
    %p52 = por %p50, %p51
    %p54 = scmp.ne.s32.totalorder %s37, %s53
    %p55 = scmp.eq.s32.totalorder %s15, 0
    %p56 = por %p54, %p55
    %s57 = ssub.s32 %s16, %s28
    %s58 = ssub.s32 %s17, %s24
    %s59 = sor.u32 %s57, %s58
    %p60 = scmp.eq.s32.totalorder %s59, 0
    %s62 = sadd.s32 %s61, 1
    %s63 = scalar_select %p60, %s61, %s62
    %p66 = pneg %p60
    %p67 = scmp.eq.s32.totalorder %s9, 1
    %p68 = por %p66, %p67
    %p69 = scmp.ne.s32.totalorder %s61, %s64
    %p70 = scmp.eq.s32.totalorder %s9, 0
    %p71 = por %p69, %p70
    %p72 = scmp.ne.s32.totalorder %s61, %s64
    %p73 = scmp.eq.s32.totalorder %s14, 1
    %p74 = por %p72, %p73
    %p75 = scmp.ne.s32.totalorder %s64, %s65
    %p76 = scmp.eq.s32.totalorder %s14, 0
    %p77 = por %p75, %p76
    %p78 = scmp.ne.s32.totalorder %s64, %s65
    %p79 = scmp.eq.s32.totalorder %s15, 1
    %p80 = por %p78, %p79
    %p82 = scmp.ne.s32.totalorder %s65, %s81
    %p83 = scmp.eq.s32.totalorder %s15, 0
    %p84 = por %p82, %p83
    %s86 = sadd.s32 %s85, 1
    %p89 = scmp.eq.s32.totalorder %s9, 1
    %p90 = scmp.ne.s32.totalorder %s85, %s87
    %p91 = scmp.eq.s32.totalorder %s9, 0
    %p92 = por %p90, %p91
    %p93 = scmp.ne.s32.totalorder %s85, %s87
    %p94 = scmp.eq.s32.totalorder %s14, 1
    %p95 = por %p93, %p94
    %p96 = scmp.ne.s32.totalorder %s87, %s88
    %p97 = scmp.eq.s32.totalorder %s14, 0
    %p98 = por %p96, %p97
    %p99 = scmp.ne.s32.totalorder %s87, %s88
    %p100 = scmp.eq.s32.totalorder %s15, 1
    %p101 = por %p99, %p100
    %p103 = scmp.ne.s32.totalorder %s88, %s102
    %p104 = scmp.eq.s32.totalorder %s15, 0
    %p105 = por %p103, %p104
    %s106 = ssub.s32 %s16, %s28
    %s107 = ssub.s32 %s17, %s24
    %s108 = sor.u32 %s106, %s107
    %p109 = scmp.eq.s32.totalorder %s108, 0
    %s111 = sadd.s32 %s110, 1
    %s112 = scalar_select %p109, %s110, %s111
    %p115 = pneg %p109
    %p116 = scmp.eq.s32.totalorder %s9, 1
    %p117 = por %p115, %p116
    %p118 = scmp.ne.s32.totalorder %s110, %s113
    %p119 = scmp.eq.s32.totalorder %s9, 0
    %p120 = por %p118, %p119
    %p121 = scmp.ne.s32.totalorder %s110, %s113
    %p122 = scmp.eq.s32.totalorder %s14, 1
    %p123 = por %p121, %p122
    %p124 = scmp.ne.s32.totalorder %s113, %s114
    %p125 = scmp.eq.s32.totalorder %s14, 0
    %p126 = por %p124, %p125
    %p127 = scmp.ne.s32.totalorder %s113, %s114
    %p128 = scmp.eq.s32.totalorder %s15, 1
    %p129 = por %p127, %p128
    %p131 = scmp.ne.s32.totalorder %s114, %s130
    %p132 = scmp.eq.s32.totalorder %s15, 0
    %p133 = por %p131, %p132
    %p134 = scmp.le.s32.totalorder 1, %s9
    %p135 = scmp.lt.s32.totalorder %s9, 3
    %p136 = pnand %p134, %p135
    %p137 = pneg %p136
    // Predicated region
    $region9: #{bottleneck_forward.7} parent=5 // pred_check
      _
    $region10: #{bottleneck_forward.7} parent=5 // pred_check_branch
      %139 = sbr.rel (%p136) target = $region12
    $region11: #{bottleneck_forward.7} parent=5 // pred_region
      %s140 = ssub.s32 %s9, 1
      // Predicated region
      $region13: #{bottleneck_forward.7} parent=11 // pred_check
        %p141 = pneg %p98
      $region14: #{bottleneck_forward.7} parent=11 // pred_check_branch
        %143 = sbr.rel (%p141) target = $region16
      $region15: #{bottleneck_forward.7} parent=11 // pred_region
        _
      $region16: #{bottleneck_forward.7} parent=11 // pred_fallthru
        _
    $region12: #{bottleneck_forward.7} parent=5 // pred_fallthru
      _
    %p144 = scmp.lt.s32.totalorder %s9, 2
    // Predicated region
    $region17: #{bottleneck_forward.7} parent=5 // pred_check
      %p145 = pneg %p144
    $region18: #{bottleneck_forward.7} parent=5 // pred_check_branch
      %147 = sbr.rel (%p145) target = $region20
    $region19: #{bottleneck_forward.7} parent=5 // pred_region
      // Predicated region
      $region21: #{bottleneck_forward.7} parent=19 // pred_check
        %p148 = pneg %p43
      $region22: #{bottleneck_forward.7} parent=19 // pred_check_branch
        %150 = sbr.rel (%p148) target = $region24
      $region23: #{bottleneck_forward.7} parent=19 // pred_region
        %s151 = smul.u32 2, %s17
        %p152 = scmp.lt.s32.totalorder %s16, 1
        %s153 = scalar_select %p152, %s16, 1
        %p154 = scmp.lt.s32.totalorder %s151, 1
        %s155 = scalar_select %p154, %s151, 1
        %s156 = smul.addr %s153, 4
        %s157 = sadd.s32 %s155, %s156
        %s158 = smul.addr %s157, 4
        %s159 = scalar_lea.vmem %s0, %s158
        %s160 = smul.u32 2, %s17
      $region24: #{bottleneck_forward.7} parent=19 // pred_fallthru
        _
      // Predicated region
      $region25: #{bottleneck_forward.7} parent=19 // pred_check
        %p161 = pneg %p71
      $region26: #{bottleneck_forward.7} parent=19 // pred_check_branch
        %163 = sbr.rel (%p161) target = $region28
      $region27: #{bottleneck_forward.7} parent=19 // pred_region
        %s164 = smul.u32 2, %s17
        %p165 = scmp.lt.s32.totalorder %s16, 1
        %s166 = scalar_select %p165, %s16, 1
        %p167 = scmp.lt.s32.totalorder %s164, 1
        %s168 = scalar_select %p167, %s164, 1
        %s169 = smul.addr %s166, 4
        %s170 = sadd.s32 %s168, %s169
        %s171 = smul.addr %s170, 8
        %s172 = scalar_lea.vmem %s1, %s171
        %s173 = smul.u32 2, %s17
      $region28: #{bottleneck_forward.7} parent=19 // pred_fallthru
        _
    $region20: #{bottleneck_forward.7} parent=5 // pred_fallthru
      _
    %p174 = scmp.le.s32.totalorder 1, %s9
    %p175 = scmp.lt.s32.totalorder %s9, 3
    %p176 = pnand %p174, %p175
    %p177 = pneg %p176
    // Predicated region
    $region29: #{bottleneck_forward.7} parent=5 // pred_check
      _
    $region30: #{bottleneck_forward.7} parent=5 // pred_check_branch
      %179 = sbr.rel (%p176) target = $region32
    $region31: #{bottleneck_forward.7} parent=5 // pred_region
      %s180 = ssub.s32 %s9, 1
      %s181 = smul.u32 2, %s19
      %p182 = scmp.lt.s32.totalorder %s18, 1
      %s183 = scalar_select %p182, %s18, 1
      %p184 = scmp.lt.s32.totalorder %s181, 1
      %s185 = scalar_select %p184, %s181, 1
      %s186 = smul.addr %s183, 4
      %s187 = sadd.s32 %s185, %s186
      %s188 = smul.addr %s187, 4
      %s189 = scalar_lea.vmem %s0, %s188
      %p190 = pneg %p49
      %p191 = pneg %p46
      %s192 = smul.u32 2, %s19
      %p193 = scmp.lt.s32.totalorder %s18, 1
      %s194 = scalar_select %p193, %s18, 1
      %p195 = scmp.lt.s32.totalorder %s192, 1
      %s196 = scalar_select %p195, %s192, 1
      %s197 = smul.addr %s194, 4
      %s198 = sadd.s32 %s196, %s197
      %s199 = smul.addr %s198, 8
      %s200 = scalar_lea.vmem %s1, %s199
      %p201 = pneg %p77
      %p202 = pneg %p74
      %p203 = pneg %p98
      %p204 = pneg %p95
      %p205 = pneg %p126
      %p206 = pneg %p123
      %s207 = smul.u32 2, %s19
      %p208 = scmp.lt.s32.totalorder %s18, 1
      %s209 = scalar_select %p208, %s18, 1
      %p210 = scmp.lt.s32.totalorder %s207, 1
      %s211 = scalar_select %p210, %s207, 1
      %s212 = smul.addr %s209, 4
      %s213 = sadd.s32 %s211, %s212
      %s214 = smul.addr %s213, 8
      %s215 = scalar_lea.vmem %s3, %s214
      %s216 = smul.u32 2, %s19
      %p217 = scmp.lt.s32.totalorder %s18, 1
      %s218 = scalar_select %p217, %s18, 1
      %p219 = scmp.lt.s32.totalorder %s216, 1
      %s220 = scalar_select %p219, %s216, 1
      %s221 = smul.addr %s218, 4
      %s222 = sadd.s32 %s220, %s221
      %s223 = smul.addr %s222, 4
      %s224 = scalar_lea.vmem %s0, %s223
      %s225 = smul.u32 2, %s19
      %s226 = smul.u32 2, %s19
      %p227 = scmp.lt.s32.totalorder %s18, 1
      %s228 = scalar_select %p227, %s18, 1
      %p229 = scmp.lt.s32.totalorder %s226, 1
      %s230 = scalar_select %p229, %s226, 1
      %s231 = smul.addr %s228, 4
      %s232 = sadd.s32 %s230, %s231
      %s233 = smul.addr %s232, 8
      %s234 = scalar_lea.vmem %s1, %s233
      %s235 = smul.u32 2, %s19
      %s236 = smul.u32 2, %s19
      %p237 = scmp.lt.s32.totalorder %s18, 1
      %s238 = scalar_select %p237, %s18, 1
      %p239 = scmp.lt.s32.totalorder %s236, 1
      %s240 = scalar_select %p239, %s236, 1
      %s241 = smul.addr %s238, 4
      %s242 = sadd.s32 %s240, %s241
      %s243 = smul.addr %s242, 8
      %s244 = scalar_lea.vmem %s3, %s243
      %s245 = smul.u32 2, %s19
      %v246 = vld [vmem:[%s224] sm:$0xff]
      %v247 = vld [vmem:[%s224 + $0x8] sm:$0xff]
      %v248 = vunpack.c.l.bf16 %v246
      %v249 = vunpack.c.h.bf16 %v246
      %v250 = vunpack.c.l.bf16 %v247
      %v251 = vunpack.c.h.bf16 %v247
      %v252 = vld [vmem:[%s2] sm:$0xff]
      %v253 = vld [vmem:[%s2 + $0x8] sm:$0xff]
      %255 = vset.pattern.permute.xlu0 0
      %256 = vperm.xlu0 %255, %v252
      %v257 = vpop.permute.xlu0 %256
      %260 = vset.pattern.permute.xlu0 0
      %261 = vperm.xlu0 %260, %v253
      %v262 = vpop.permute.xlu0 %261
      %v264 = vmul.f32 %v248, %v257
      %v265 = vmul.f32 %v249, %v257
      %v266 = vmul.f32 %v250, %v262
      %v267 = vmul.f32 %v251, %v262
      %268 = vset.pattern.permute.xlu0 1
      %269 = vperm.xlu0 %268, %v252
      %v270 = vpop.permute.xlu0 %269
      %272 = vset.pattern.permute.xlu0 1
      %273 = vperm.xlu0 %272, %v253
      %v274 = vpop.permute.xlu0 %273
      %v276 = vadd.f32 %v264, %v270
      %v277 = vadd.f32 %v265, %v270
      %v278 = vadd.f32 %v266, %v274
      %v279 = vadd.f32 %v267, %v274
      %v280 = vld [vmem:[%s234] sm:$0xff]
      %v281 = vld [vmem:[%s234 + $0x8] sm:$0xff]
      %v282 = vld [vmem:[%s234 + $0x10] sm:$0xff]
      %v283 = vld [vmem:[%s234 + $0x18] sm:$0xff]
      %v284 = vadd.f32 %v276, %v280
      %v285 = vadd.f32 %v277, %v281
      %v286 = vadd.f32 %v278, %v282
      %v287 = vadd.f32 %v279, %v283
      %v288 = vmax.f32 %v284, 0.0
      %v289 = vmax.f32 %v285, 0.0
      %v290 = vmax.f32 %v286, 0.0
      %v291 = vmax.f32 %v287, 0.0
      %292 = vst [vmem:[%s244] sm:$0xff] %v288
      %293 = vst [vmem:[%s244 + $0x8] sm:$0xff] %v289
      %294 = vst [vmem:[%s244 + $0x10] sm:$0xff] %v290
      %295 = vst [vmem:[%s244 + $0x18] sm:$0xff] %v291
      %s296 = smul.u32 2, %s19
      %p297 = scmp.lt.s32.totalorder %s18, 1
      %s298 = scalar_select %p297, %s18, 1
      %p299 = scmp.lt.s32.totalorder %s296, 1
      %s300 = scalar_select %p299, %s296, 1
      %s301 = smul.addr %s298, 4
      %s302 = sadd.s32 %s300, %s301
      %s303 = smul.addr %s302, 8
      %s304 = scalar_lea.vmem %s3, %s303
      // Predicated region
      $region33: #{bottleneck_forward.7} parent=31 // pred_check
        %p305 = pneg %p123
      $region34: #{bottleneck_forward.7} parent=31 // pred_check_branch
        %307 = sbr.rel (%p305) target = $region36
      $region35: #{bottleneck_forward.7} parent=31 // pred_region
        %s308 = smul.u32 2, %s19
      $region36: #{bottleneck_forward.7} parent=31 // pred_fallthru
        _
    $region32: #{bottleneck_forward.7} parent=5 // pred_fallthru
      _
    %p309 = scmp.le.s32.totalorder 2, %s9
    // Predicated region
    $region37: #{bottleneck_forward.7} parent=5 // pred_check
      %p310 = pneg %p309
    $region38: #{bottleneck_forward.7} parent=5 // pred_check_branch
      %312 = sbr.rel (%p310) target = $region40
    $region39: #{bottleneck_forward.7} parent=5 // pred_region
      %s313 = ssub.s32 %s9, 2
      // Predicated region
      $region41: #{bottleneck_forward.7} parent=39 // pred_check
        %p314 = pneg %p129
      $region42: #{bottleneck_forward.7} parent=39 // pred_check_branch
        %316 = sbr.rel (%p314) target = $region44
      $region43: #{bottleneck_forward.7} parent=39 // pred_region
        %s317 = smul.u32 2, %s21
        %p318 = scmp.lt.s32.totalorder %s20, 1
        %s319 = scalar_select %p318, %s20, 1
        %p320 = scmp.lt.s32.totalorder %s317, 1
        %s321 = scalar_select %p320, %s317, 1
        %s322 = smul.addr %s319, 4
        %s323 = sadd.s32 %s321, %s322
        %s324 = smul.addr %s323, 8
        %s325 = scalar_lea.vmem %s3, %s324
      $region44: #{bottleneck_forward.7} parent=39 // pred_fallthru
        _
    $region40: #{bottleneck_forward.7} parent=5 // pred_fallthru
      _
  $region6: #{bottleneck_forward.7} parent=0 // loop_footer
    %s13 = sadd.s32 1, %s9
  $region7: #{bottleneck_forward.7} parent=0 // loop_footer_branch
    %8 = sbr.rel target = $region3
  $region8: #{bottleneck_forward.7} parent=0 // loop_exit
    _

</llo_original>
